<compile_context>
chip_gen: v7x
topology: tpu7x:2x2x1
jax: 0.10.0
libtpu: 0.0.40
codegen_flags: <defaults>
</compile_context>

<pallas_src>
import functools

import jax
import jax.numpy as jnp
import numpy as np
from jax import lax
from jax.experimental import pallas as pl
from jax.experimental.pallas import tpu as pltpu  # noqa: F401  (kept for TPU-specific tuning hooks)


def _block_kernel(x_ref, w1_ref, b1_ref, w2_ref, b2_ref, rsm_ref, rsp_ref,
                  *rest, stride, has_proj, identity_sc, W, P):
    if stride > 1:
        rs0_ref, w3_ref, b3_ref, o_ref = rest
    else:
        w3_ref, b3_ref, o_ref = rest

    WP = W * P

    x = x_ref[...]                                  # (N*H, W*Cin) f32
    xb = x.astype(jnp.bfloat16)

    # ---- Stage 1: 1x1 expand conv + BN + ReLU (BN scale folded into w1).
    # w1_ref holds three lane-blocks: [center | col-shift -1 | col-shift +1];
    # the shifted copies are the column taps of the depthwise conv.  Padding
    # columns were given a -1e9 bias, so ReLU forces exact zeros there.
    u = jnp.dot(xb, w1_ref[...], preferred_element_type=jnp.float32)
    u = jnp.maximum(u + b1_ref[...], 0.0)           # (N*H, 3*WP) f32

    cols = (u[:, WP:2 * WP],        # kx = 0 -> input column w-1
            u[:, 0:WP],             # kx = 1 -> input column w
            u[:, 2 * WP:3 * WP])    # kx = 2 -> input column w+1

    # ---- Stage 2: depthwise 3x3 (BN2 scale folded into the tap weights).
    # Lane part: per-lane multiplies by the 9 tap-weight vectors (aligned lane
    # slices of w2_ref).  Row part (ky offsets, row stride, batch-image
    # boundaries): tiny row-shift matmuls on the otherwise idle MXU.
    C = []
    for ky in range(3):
        k0 = ky * 3
        acc = cols[0] * w2_ref[:, k0 * WP:(k0 + 1) * WP]
        for kx in (1, 2):
            k = k0 + kx
            acc = acc + cols[kx] * w2_ref[:, k * WP:(k + 1) * WP]
        C.append(acc)                               # (N*H, WP) f32

    if stride == 1:
        dw = C[1]                                   # center-row tap, exact f32
    else:
        dw = jnp.dot(rs0_ref[...], C[1].astype(jnp.bfloat16),
                     preferred_element_type=jnp.float32)
    dw = dw + jnp.dot(rsm_ref[...], C[0].astype(jnp.bfloat16),
                      preferred_element_type=jnp.float32)
    dw = dw + jnp.dot(rsp_ref[...], C[2].astype(jnp.bfloat16),
                      preferred_element_type=jnp.float32)
    t2 = jnp.maximum(dw + b2_ref[...], 0.0)         # (N*Ho, WP) f32

    # ---- Stage 3: 1x1 project + BN (+ fused conv shortcut when present).
    lhs = t2.astype(jnp.bfloat16)
    if has_proj:
        lhs = jnp.concatenate([lhs, xb], axis=1)    # contract [t2 | x] at once
    out = jnp.dot(lhs, w3_ref[...], preferred_element_type=jnp.float32)
    out = out + b3_ref[...]                         # (N*Ho, Wo*Cout)
    if identity_sc:
        out = out + x                               # identity shortcut
    o_ref[...] = out


def _expand_pointwise(w, sel):
    """Lane-dense weight for a 1x1 conv.

    w: (cin, cout); sel: (W_in, W_out) 0/1 matrix selecting which input
    spatial column feeds which output spatial column.  Returns
    (W_in*cin, W_out*cout) with row index w_in*cin + c, col index w_out*cout+o.
    """
    big = jnp.einsum("rc,io->rico", sel, w)
    return big.reshape(sel.shape[0] * w.shape[0], sel.shape[1] * w.shape[1])


def prepare_block_params(params, *, stride, N, H, W):
    """One-time (parameter-load-time) construction of the inflated weights."""
    Cin, P = params["w1"].shape
    Cout = params["w3"].shape[1]
    has_proj = (stride == 1 and Cin != Cout)
    identity_sc = (stride == 1 and Cin == Cout)
    Ho = (H + 2 - 3) // stride + 1
    Wo = (W + 2 - 3) // stride + 1
    WP = W * P
    f32 = jnp.float32
    ar = jnp.arange(W)

    # Stage 1: BN1 scale folded in; center + two column-shifted copies.
    w1s = params["w1"] * params["s1"].reshape(1, P)
    sel_0 = (ar[:, None] == ar[None, :]).astype(f32)
    sel_m1 = (ar[:, None] == ar[None, :] - 1).astype(f32)   # in col = out col-1
    sel_p1 = (ar[:, None] == ar[None, :] + 1).astype(f32)   # in col = out col+1
    w1_all = jnp.concatenate(
        [_expand_pointwise(w1s, sel_0),
         _expand_pointwise(w1s, sel_m1),
         _expand_pointwise(w1s, sel_p1)], axis=1).astype(jnp.bfloat16)
    b1_t = jnp.tile(params["b1"].reshape(P), W)              # (WP,)
    w_idx = jnp.repeat(ar, P)
    # -1e9 bias on padding columns -> ReLU yields exact zeros (no masks needed).
    b1_m1 = jnp.where(w_idx == 0, -1e9, b1_t)
    b1_p1 = jnp.where(w_idx == W - 1, -1e9, b1_t)
    b1_all = jnp.concatenate([b1_t, b1_m1, b1_p1]).reshape(1, 3 * WP)

    # Stage 2: depthwise tap weights with BN2 scale folded in.
    w2s = params["w2"] * params["s2"].reshape(1, 1, P)       # (3,3,P)
    w2_flat = jnp.tile(w2s.reshape(9, P), (1, W)).reshape(1, 9 * WP)
    b2_t = jnp.tile(params["b2"].reshape(P), W).reshape(1, WP)

    # Row-shift / row-subsample matrices (also encode batch-image boundaries).
    def row_shift(dy):
        rows = np.arange(N * Ho)
        n, ho = rows // Ho, rows % Ho
        h = stride * ho + dy
        valid = (h >= 0) & (h < H)
        m = np.zeros((N * Ho, N * H), np.float32)
        m[rows[valid], (n * H + h)[valid]] = 1.0
        return jnp.asarray(m, jnp.bfloat16)
    rs_m1, rs_0, rs_p1 = row_shift(-1), row_shift(0), row_shift(1)

    # Stage 3: BN3 scale + column stride folded into w3; conv shortcut fused.
    sel3 = (ar[:, None] == stride * jnp.arange(Wo)[None, :]).astype(f32)
    w3s = params["w3"] * params["s3"].reshape(1, Cout)
    w3_big = _expand_pointwise(w3s, sel3)                    # (WP, Wo*Cout)
    b3_t = jnp.tile(params["b3"].reshape(Cout), Wo)
    if has_proj:
        wscs = params["wsc"] * params["ssc"].reshape(1, Cout)
        wsc_big = _expand_pointwise(wscs, sel_0)             # (W*Cin, W*Cout)
        w3_all = jnp.concatenate([w3_big, wsc_big], axis=0)
        b3_all = (b3_t + jnp.tile(params["bsc"].reshape(Cout), Wo)).reshape(1, -1)
    else:
        w3_all = w3_big
        b3_all = b3_t.reshape(1, -1)
    w3_all = w3_all.astype(jnp.bfloat16)

    prep = dict(w1_all=w1_all, b1_all=b1_all, w2_flat=w2_flat, b2_t=b2_t,
                rs_m1=rs_m1, rs_0=rs_0, rs_p1=rs_p1,
                w3_all=w3_all, b3_all=b3_all)
    meta = dict(stride=stride, has_proj=has_proj, identity_sc=identity_sc,
                N=N, H=H, W=W, Cin=Cin, P=P, Cout=Cout, Ho=Ho, Wo=Wo)
    return prep, meta


def mobilenet_block(x_nhwc, prep, meta):
    N, H, W = meta["N"], meta["H"], meta["W"]
    Cin, P, Cout = meta["Cin"], meta["P"], meta["Cout"]
    Ho, Wo, stride = meta["Ho"], meta["Wo"], meta["stride"]

    x_ld = x_nhwc.reshape(N * H, W * Cin)        # lane-dense, free reshape
    args = [x_ld, prep["w1_all"], prep["b1_all"], prep["w2_flat"], prep["b2_t"],
            prep["rs_m1"], prep["rs_p1"]]
    if stride > 1:
        args.append(prep["rs_0"])
    args += [prep["w3_all"], prep["b3_all"]]

    kernel = functools.partial(
        _block_kernel, stride=stride, has_proj=meta["has_proj"],
        identity_sc=meta["identity_sc"], W=W, P=P)

    out_ld = pl.pallas_call(
        kernel,
        out_shape=jax.ShapeDtypeStruct((N * Ho, Wo * Cout), jnp.float32),
    )(*args)
    return out_ld.reshape(N, Ho, Wo, Cout)


def reference_block(x_nhwc, params, *, stride):
    """Plain-JAX reference (lax.conv) used only to validate the kernel."""
    dn = ("NHWC", "HWIO", "NHWC")
    Cin = x_nhwc.shape[-1]
    P = params["w1"].shape[1]
    Cout = params["w3"].shape[1]
    w1 = params["w1"].reshape(1, 1, Cin, P)
    w2 = params["w2"].reshape(3, 3, 1, P)
    w3 = params["w3"].reshape(1, 1, P, Cout)

    t = lax.conv_general_dilated(x_nhwc, w1, (1, 1), "VALID",
                                 dimension_numbers=dn)
    t = jnp.maximum(t * params["s1"] + params["b1"], 0.0)
    t = lax.conv_general_dilated(t, w2, (stride, stride), ((1, 1), (1, 1)),
                                 dimension_numbers=dn, feature_group_count=P)
    t = jnp.maximum(t * params["s2"] + params["b2"], 0.0)
    t = lax.conv_general_dilated(t, w3, (1, 1), "VALID",
                                 dimension_numbers=dn)
    out = t * params["s3"] + params["b3"]
    if stride == 1:
        if Cin != Cout:
            wsc = params["wsc"].reshape(1, 1, Cin, Cout)
            sc = lax.conv_general_dilated(x_nhwc, wsc, (1, 1), "VALID",
                                          dimension_numbers=dn)
            sc = sc * params["ssc"] + params["bsc"]
        else:
            sc = x_nhwc
        out = out + sc
    return out


def _bn_fold(key, c):
    k1, k2, k3, k4 = jax.random.split(key, 4)
    gamma = 1.0 + 0.1 * jax.random.normal(k1, (c,), jnp.float32)
    beta = 0.1 * jax.random.normal(k2, (c,), jnp.float32)
    mean = 0.1 * jax.random.normal(k3, (c,), jnp.float32)
    var = jnp.abs(jax.random.normal(k4, (c,), jnp.float32)) + 1.0
    scale = gamma / jnp.sqrt(var + 1e-5)
    bias = beta - mean * scale
    return scale.reshape(1, c), bias.reshape(1, c)


def _make_params(key, in_planes, out_planes, expansion, stride):
    planes = expansion * in_planes
    ks = jax.random.split(key, 9)
    p = {}
    p["w1"] = 0.2 * jax.random.normal(ks[0], (in_planes, planes), jnp.float32)
    p["s1"], p["b1"] = _bn_fold(ks[1], planes)
    p["w2"] = 0.2 * jax.random.normal(ks[2], (3, 3, planes), jnp.float32)
    p["s2"], p["b2"] = _bn_fold(ks[3], planes)
    p["w3"] = 0.2 * jax.random.normal(ks[4], (planes, out_planes), jnp.float32)
    p["s3"], p["b3"] = _bn_fold(ks[5], out_planes)
    if stride == 1 and in_planes != out_planes:
        p["wsc"] = 0.2 * jax.random.normal(ks[6], (in_planes, out_planes),
                                           jnp.float32)
        p["ssc"], p["bsc"] = _bn_fold(ks[7], out_planes)
    return p, ks[8]


if __name__ == "__main__":
    N, H, W = 2, 16, 16
    key = jax.random.PRNGKey(0)

    # (in_planes, out_planes, expansion, stride):
    #   conv shortcut / identity shortcut / stride-2 (no shortcut).
    configs = [(8, 16, 4, 1), (8, 8, 4, 1), (8, 16, 4, 2)]

    for (cin, cout, expansion, stride) in configs:
        key, sub = jax.random.split(key)
        params, xkey = _make_params(sub, cin, cout, expansion, stride)

        # PyTorch-style NCHW input -> NHWC for the kernel wrapper.
        x_nchw = jax.random.normal(xkey, (N, cin, H, W), jnp.float32)
        x_nhwc = jnp.transpose(x_nchw, (0, 2, 3, 1))

        # One-time weight inflation (parameter-load time), then the kernel.
        prep, meta = prepare_block_params(params, stride=stride, N=N, H=H, W=W)
        out = jax.block_until_ready(mobilenet_block(x_nhwc, prep, meta))

        ref = reference_block(x_nhwc, params, stride=stride)
        assert out.shape == ref.shape, (out.shape, ref.shape)
        np.testing.assert_allclose(np.asarray(out), np.asarray(ref),
                                   atol=2e-2, rtol=2e-2)

    print("KERNEL_OK")
</pallas_src>

<mosaic_0001>
module attributes {stable_mosaic.version = 11 : i64} {
  func.func @_block_kernel(%arg0: memref<32x128xf32, #tpu.memory_space<vmem>>, %arg1: memref<128x1536xbf16, #tpu.memory_space<vmem>>, %arg2: memref<1x1536xf32, #tpu.memory_space<vmem>>, %arg3: memref<1x4608xf32, #tpu.memory_space<vmem>>, %arg4: memref<1x512xf32, #tpu.memory_space<vmem>>, %arg5: memref<32x32xbf16, #tpu.memory_space<vmem>>, %arg6: memref<32x32xbf16, #tpu.memory_space<vmem>>, %arg7: memref<640x256xbf16, #tpu.memory_space<vmem>>, %arg8: memref<1x256xf32, #tpu.memory_space<vmem>>, %arg9: memref<32x256xf32, #tpu.memory_space<vmem>>) attributes {dimension_semantics = [], scalar_prefetch = 0 : i64, scratch_operands = 0 : i64, tpu.core_type = #tpu.core_type<tc>} {
    %c0 = arith.constant 0 : index
    %c0_0 = arith.constant 0 : index
    %0 = vector.load %arg0[%c0, %c0_0] : memref<32x128xf32, #tpu.memory_space<vmem>>, vector<32x128xf32>
    %1 = arith.truncf %0 : vector<32x128xf32> to vector<32x128xbf16>
    %c0_1 = arith.constant 0 : index
    %c0_2 = arith.constant 0 : index
    %2 = vector.load %arg1[%c0_1, %c0_2] : memref<128x1536xbf16, #tpu.memory_space<vmem>>, vector<128x1536xbf16>
    %cst = arith.constant dense<0.000000e+00> : vector<32x1536xf32>
    %3 = tpu.matmul %1, %2, %cst {dimension_numbers = #tpu.dot_dimension_numbers<[1], [0], [0], [1], [0, 0, 1, 1], [], []>} : vector<32x128xbf16>, vector<128x1536xbf16>, vector<32x1536xf32> -> vector<32x1536xf32>
    %c0_3 = arith.constant 0 : index
    %c0_4 = arith.constant 0 : index
    %4 = vector.load %arg2[%c0_3, %c0_4] : memref<1x1536xf32, #tpu.memory_space<vmem>>, vector<1x1536xf32>
    %5 = vector.broadcast %4 : vector<1x1536xf32> to vector<32x1536xf32>
    %6 = arith.addf %3, %5 : vector<32x1536xf32>
    %cst_5 = arith.constant 0.000000e+00 : f32
    %7 = vector.broadcast %cst_5 : f32 to vector<32x1536xf32>
    %8 = arith.maximumf %6, %7 : vector<32x1536xf32>
    %9 = vector.extract_strided_slice %8 {offsets = [0, 512], sizes = [32, 512], strides = [1, 1]} : vector<32x1536xf32> to vector<32x512xf32>
    %10 = vector.extract_strided_slice %8 {offsets = [0, 0], sizes = [32, 512], strides = [1, 1]} : vector<32x1536xf32> to vector<32x512xf32>
    %11 = vector.extract_strided_slice %8 {offsets = [0, 1024], sizes = [32, 512], strides = [1, 1]} : vector<32x1536xf32> to vector<32x512xf32>
    %c0_6 = arith.constant 0 : index
    %c0_7 = arith.constant 0 : index
    %12 = vector.load %arg3[%c0_6, %c0_7] : memref<1x4608xf32, #tpu.memory_space<vmem>>, vector<1x512xf32>
    %13 = vector.broadcast %12 : vector<1x512xf32> to vector<32x512xf32>
    %14 = arith.mulf %9, %13 : vector<32x512xf32>
    %c0_8 = arith.constant 0 : index
    %c512 = arith.constant 512 : index
    %15 = vector.load %arg3[%c0_8, %c512] : memref<1x4608xf32, #tpu.memory_space<vmem>>, vector<1x512xf32>
    %16 = vector.broadcast %15 : vector<1x512xf32> to vector<32x512xf32>
    %17 = arith.mulf %10, %16 : vector<32x512xf32>
    %18 = arith.addf %14, %17 : vector<32x512xf32>
    %c0_9 = arith.constant 0 : index
    %c1024 = arith.constant 1024 : index
    %19 = vector.load %arg3[%c0_9, %c1024] : memref<1x4608xf32, #tpu.memory_space<vmem>>, vector<1x512xf32>
    %20 = vector.broadcast %19 : vector<1x512xf32> to vector<32x512xf32>
    %21 = arith.mulf %11, %20 : vector<32x512xf32>
    %22 = arith.addf %18, %21 : vector<32x512xf32>
    %c0_10 = arith.constant 0 : index
    %c1536 = arith.constant 1536 : index
    %23 = vector.load %arg3[%c0_10, %c1536] : memref<1x4608xf32, #tpu.memory_space<vmem>>, vector<1x512xf32>
    %24 = vector.broadcast %23 : vector<1x512xf32> to vector<32x512xf32>
    %25 = arith.mulf %9, %24 : vector<32x512xf32>
    %c0_11 = arith.constant 0 : index
    %c2048 = arith.constant 2048 : index
    %26 = vector.load %arg3[%c0_11, %c2048] : memref<1x4608xf32, #tpu.memory_space<vmem>>, vector<1x512xf32>
    %27 = vector.broadcast %26 : vector<1x512xf32> to vector<32x512xf32>
    %28 = arith.mulf %10, %27 : vector<32x512xf32>
    %29 = arith.addf %25, %28 : vector<32x512xf32>
    %c0_12 = arith.constant 0 : index
    %c2560 = arith.constant 2560 : index
    %30 = vector.load %arg3[%c0_12, %c2560] : memref<1x4608xf32, #tpu.memory_space<vmem>>, vector<1x512xf32>
    %31 = vector.broadcast %30 : vector<1x512xf32> to vector<32x512xf32>
    %32 = arith.mulf %11, %31 : vector<32x512xf32>
    %33 = arith.addf %29, %32 : vector<32x512xf32>
    %c0_13 = arith.constant 0 : index
    %c3072 = arith.constant 3072 : index
    %34 = vector.load %arg3[%c0_13, %c3072] : memref<1x4608xf32, #tpu.memory_space<vmem>>, vector<1x512xf32>
    %35 = vector.broadcast %34 : vector<1x512xf32> to vector<32x512xf32>
    %36 = arith.mulf %9, %35 : vector<32x512xf32>
    %c0_14 = arith.constant 0 : index
    %c3584 = arith.constant 3584 : index
    %37 = vector.load %arg3[%c0_14, %c3584] : memref<1x4608xf32, #tpu.memory_space<vmem>>, vector<1x512xf32>
    %38 = vector.broadcast %37 : vector<1x512xf32> to vector<32x512xf32>
    %39 = arith.mulf %10, %38 : vector<32x512xf32>
    %40 = arith.addf %36, %39 : vector<32x512xf32>
    %c0_15 = arith.constant 0 : index
    %c4096 = arith.constant 4096 : index
    %41 = vector.load %arg3[%c0_15, %c4096] : memref<1x4608xf32, #tpu.memory_space<vmem>>, vector<1x512xf32>
    %42 = vector.broadcast %41 : vector<1x512xf32> to vector<32x512xf32>
    %43 = arith.mulf %11, %42 : vector<32x512xf32>
    %44 = arith.addf %40, %43 : vector<32x512xf32>
    %c0_16 = arith.constant 0 : index
    %c0_17 = arith.constant 0 : index
    %45 = vector.load %arg5[%c0_16, %c0_17] : memref<32x32xbf16, #tpu.memory_space<vmem>>, vector<32x32xbf16>
    %46 = arith.truncf %22 : vector<32x512xf32> to vector<32x512xbf16>
    %cst_18 = arith.constant dense<0.000000e+00> : vector<32x512xf32>
    %47 = tpu.matmul %45, %46, %cst_18 {dimension_numbers = #tpu.dot_dimension_numbers<[1], [0], [0], [1], [0, 0, 1, 1], [], []>} : vector<32x32xbf16>, vector<32x512xbf16>, vector<32x512xf32> -> vector<32x512xf32>
    %48 = arith.addf %33, %47 : vector<32x512xf32>
    %c0_19 = arith.constant 0 : index
    %c0_20 = arith.constant 0 : index
    %49 = vector.load %arg6[%c0_19, %c0_20] : memref<32x32xbf16, #tpu.memory_space<vmem>>, vector<32x32xbf16>
    %50 = arith.truncf %44 : vector<32x512xf32> to vector<32x512xbf16>
    %cst_21 = arith.constant dense<0.000000e+00> : vector<32x512xf32>
    %51 = tpu.matmul %49, %50, %cst_21 {dimension_numbers = #tpu.dot_dimension_numbers<[1], [0], [0], [1], [0, 0, 1, 1], [], []>} : vector<32x32xbf16>, vector<32x512xbf16>, vector<32x512xf32> -> vector<32x512xf32>
    %52 = arith.addf %48, %51 : vector<32x512xf32>
    %c0_22 = arith.constant 0 : index
    %c0_23 = arith.constant 0 : index
    %53 = vector.load %arg4[%c0_22, %c0_23] : memref<1x512xf32, #tpu.memory_space<vmem>>, vector<1x512xf32>
    %54 = vector.broadcast %53 : vector<1x512xf32> to vector<32x512xf32>
    %55 = arith.addf %52, %54 : vector<32x512xf32>
    %cst_24 = arith.constant 0.000000e+00 : f32
    %56 = vector.broadcast %cst_24 : f32 to vector<32x512xf32>
    %57 = arith.maximumf %55, %56 : vector<32x512xf32>
    %58 = arith.truncf %57 : vector<32x512xf32> to vector<32x512xbf16>
    %59 = tpu.concatenate %58, %1 in 1 : vector<32x512xbf16>, vector<32x128xbf16> -> vector<32x640xbf16>
    %c0_25 = arith.constant 0 : index
    %c0_26 = arith.constant 0 : index
    %60 = vector.load %arg7[%c0_25, %c0_26] : memref<640x256xbf16, #tpu.memory_space<vmem>>, vector<640x256xbf16>
    %cst_27 = arith.constant dense<0.000000e+00> : vector<32x256xf32>
    %61 = tpu.matmul %59, %60, %cst_27 {dimension_numbers = #tpu.dot_dimension_numbers<[1], [0], [0], [1], [0, 0, 1, 1], [], []>} : vector<32x640xbf16>, vector<640x256xbf16>, vector<32x256xf32> -> vector<32x256xf32>
    %c0_28 = arith.constant 0 : index
    %c0_29 = arith.constant 0 : index
    %62 = vector.load %arg8[%c0_28, %c0_29] : memref<1x256xf32, #tpu.memory_space<vmem>>, vector<1x256xf32>
    %63 = vector.broadcast %62 : vector<1x256xf32> to vector<32x256xf32>
    %64 = arith.addf %61, %63 : vector<32x256xf32>
    %c0_30 = arith.constant 0 : index
    %c0_31 = arith.constant 0 : index
    %65 = vector.load %arg9[%c0_30, %c0_31] : memref<32x256xf32, #tpu.memory_space<vmem>>, vector<32x256xf32>
    tpu.vector_store %arg9[%c0_30, %c0_31], %64 {strides = array<i32>} : memref<32x256xf32, #tpu.memory_space<vmem>>, vector<32x256xf32>,
    return
  }
}

</mosaic_0001>

<llo_original>
// kernel: tpu_custom_call.1
$region0: #{tpu_custom_call.1}
  #allocation0 [shape = 'u32[]', space=smem, size = 0x4, offset = 0x4, fixed_abs, tag = 'smem constant byte address 0x4 - core index']
  #allocation1 [shape = 'u32[144,128]{1,0:T(1,128)}', space=vmem, size = 0x12000, scoped, tag = 'internal scratch']
  %s0 = inlined_call_operand.hbm [shape: f32[32,128], index: 0, kind: input, shape index: {}]
  %s1 = inlined_call_operand.hbm [shape: bf16[128,1536], index: 1, kind: input, shape index: {}]
  %s2 = inlined_call_operand.hbm [shape: f32[1,1536], index: 2, kind: input, shape index: {}]
  %s3 = inlined_call_operand.hbm [shape: f32[1,4608], index: 3, kind: input, shape index: {}]
  %s4 = inlined_call_operand.hbm [shape: f32[1,512], index: 4, kind: input, shape index: {}]
  %s5 = inlined_call_operand.vmem [shape: bf16[32,32], index: 5, kind: input, shape index: {}]
  %s6 = inlined_call_operand.hbm [shape: bf16[32,32], index: 6, kind: input, shape index: {}]
  %s7 = inlined_call_operand.hbm [shape: bf16[640,256], index: 7, kind: input, shape index: {}]
  %s8 = inlined_call_operand.vmem [shape: f32[1,256], index: 8, kind: input, shape index: {}]
  %s9 = inlined_call_operand.hbm [shape: f32[32,256], index: 9, kind: output, shape index: {}]
  %s10 = sld [smem:[#allocation0]]
  $region74: #{tpu_custom_call.1} parent=0
    _
  %s12 = ssub.s32 1, %s10
  %s13 = scalar_select 0, %s12, %s10
  $region1: #{tpu_custom_call.1} parent=0
    #allocation2 [shape = 'u8[16384]{0}', space=vmem, size = 0x4000, scoped, tag = 'input window, operand 0, single buffered']
    #allocation3 [shape = 's32[1]{0}', space=sflag, size = 0x4, scoped, tag = 'scoped memory for tpu_custom_call.1']
    #allocation4 [shape = 's32[1]{0}', space=sflag, size = 0x4, scoped, tag = 'scoped memory for tpu_custom_call.1']
    #allocation5 [shape = 'u8[393216]{0}', space=vmem, size = 0x60000, scoped, tag = 'input window, operand 1, single buffered']
    #allocation6 [shape = 's32[1]{0}', space=sflag, size = 0x4, scoped, tag = 'scoped memory for tpu_custom_call.1']
    #allocation7 [shape = 'u8[6144]{0}', space=vmem, size = 0x1800, scoped, tag = 'input window, operand 2, single buffered']
    #allocation8 [shape = 'u8[18432]{0}', space=vmem, size = 0x4800, scoped, tag = 'input window, operand 3, single buffered']
    #allocation9 [shape = 's32[1]{0}', space=sflag, size = 0x4, scoped, tag = 'scoped memory for tpu_custom_call.1']
    #allocation10 [shape = 'u8[2048]{0}', space=vmem, size = 0x800, scoped, tag = 'input window, operand 4, single buffered']
    #allocation11 [shape = 'u8[8192]{0}', space=vmem, size = 0x2000, scoped, tag = 'input window, operand 6, single buffered']
    #allocation12 [shape = 's32[1]{0}', space=sflag, size = 0x4, scoped, tag = 'scoped memory for tpu_custom_call.1']
    #allocation13 [shape = 'u8[327680]{0}', space=vmem, size = 0x50000, scoped, tag = 'input window, operand 7, single buffered']
    #allocation14 [shape = 'u8[32768]{0}', space=vmem, size = 0x8000, scoped, tag = 'output window, operand 0, single buffered']
    %14 = vsyncpa [#allocation3], 0
    %15 = vsyncpa [#allocation6], 0
    %16 = vsyncpa [#allocation9], 0
    %17 = vsyncpa [#allocation12], 0
    %18 = vsyncpa [#allocation4], 0
    // Predicated region
    $region2: #{tpu_custom_call.1} parent=1 // pred_check
      _
    $region3: #{tpu_custom_call.1} parent=1 // pred_check_branch
      %20 = sbr.rel (0) target = $region5
    $region4: #{tpu_custom_call.1} parent=1 // pred_region
      %s22 = ssub.s32 512, 512
      %23 = vsyncadd [#allocation3], %s22
      %s24 = sshll.u32 [#allocation2], 4
      %s25 = int_to_ptr.vmem [resolvable:$true] %s24
      %30 = dma.hbm_to_vmem [thread:$0]  %s0, 512, %s25, [#allocation3], 128, 128, 8
    $region5: #{tpu_custom_call.1} parent=1 // pred_fallthru
      _
    // Predicated region
    $region6: #{tpu_custom_call.1} parent=1 // pred_check
      _
    $region7: #{tpu_custom_call.1} parent=1 // pred_check_branch
      %32 = sbr.rel (0) target = $region9
    $region8: #{tpu_custom_call.1} parent=1 // pred_region
      %s34 = ssub.s32 12288, 12288
      %35 = vsyncadd [#allocation6], %s34
      %s36 = sshll.u32 [#allocation5], 4
      %s37 = int_to_ptr.vmem [resolvable:$true] %s36
      %42 = dma.hbm_to_vmem [thread:$0]  %s1, 12288, %s37, [#allocation6], 768, 768, 48
    $region9: #{tpu_custom_call.1} parent=1 // pred_fallthru
      _
    // Predicated region
    $region10: #{tpu_custom_call.1} parent=1 // pred_check
      _
    $region11: #{tpu_custom_call.1} parent=1 // pred_check_branch
      %44 = sbr.rel (0) target = $region13
    $region12: #{tpu_custom_call.1} parent=1 // pred_region
      %s46 = ssub.s32 192, 192
      %47 = vsyncadd [#allocation6], %s46
      %s49 = sshll.u32 [#allocation7], 4
      %s50 = int_to_ptr.vmem [resolvable:$true] %s49
      %52 = dma.hbm_to_vmem [thread:$0]  %s2, 192, %s50, [#allocation6]
    $region13: #{tpu_custom_call.1} parent=1 // pred_fallthru
      _
    // Predicated region
    $region14: #{tpu_custom_call.1} parent=1 // pred_check
      _
    $region15: #{tpu_custom_call.1} parent=1 // pred_check_branch
      %54 = sbr.rel (0) target = $region17
    $region16: #{tpu_custom_call.1} parent=1 // pred_region
      %s56 = ssub.s32 576, 576
      %57 = vsyncadd [#allocation9], %s56
      %s59 = sshll.u32 [#allocation8], 4
      %s60 = int_to_ptr.vmem [resolvable:$true] %s59
      %62 = dma.hbm_to_vmem [thread:$0]  %s3, 576, %s60, [#allocation9]
    $region17: #{tpu_custom_call.1} parent=1 // pred_fallthru
      _
    // Predicated region
    $region18: #{tpu_custom_call.1} parent=1 // pred_check
      _
    $region19: #{tpu_custom_call.1} parent=1 // pred_check_branch
      %64 = sbr.rel (0) target = $region21
    $region20: #{tpu_custom_call.1} parent=1 // pred_region
      %s66 = ssub.s32 64, 64
      %67 = vsyncadd [#allocation9], %s66
      %s69 = sshll.u32 [#allocation10], 4
      %s70 = int_to_ptr.vmem [resolvable:$true] %s69
      %72 = dma.hbm_to_vmem [thread:$0]  %s4, 64, %s70, [#allocation9]
    $region21: #{tpu_custom_call.1} parent=1 // pred_fallthru
      _
    // Predicated region
    $region22: #{tpu_custom_call.1} parent=1 // pred_check
      _
    $region23: #{tpu_custom_call.1} parent=1 // pred_check_branch
      %74 = sbr.rel (0) target = $region25
    $region24: #{tpu_custom_call.1} parent=1 // pred_region
      _
    $region25: #{tpu_custom_call.1} parent=1 // pred_fallthru
      _
    // Predicated region
    $region26: #{tpu_custom_call.1} parent=1 // pred_check
      _
    $region27: #{tpu_custom_call.1} parent=1 // pred_check_branch
      %76 = sbr.rel (0) target = $region29
    $region28: #{tpu_custom_call.1} parent=1 // pred_region
      %s78 = ssub.s32 256, 256
      %79 = vsyncadd [#allocation12], %s78
      %s80 = sshll.u32 [#allocation11], 4
      %s81 = int_to_ptr.vmem [resolvable:$true] %s80
      %86 = dma.hbm_to_vmem [thread:$0]  %s6, 256, %s81, [#allocation12], 64, 64, 4
    $region29: #{tpu_custom_call.1} parent=1 // pred_fallthru
      _
    // Predicated region
    $region30: #{tpu_custom_call.1} parent=1 // pred_check
      _
    $region31: #{tpu_custom_call.1} parent=1 // pred_check_branch
      %88 = sbr.rel (0) target = $region33
    $region32: #{tpu_custom_call.1} parent=1 // pred_region
      %s90 = ssub.s32 10240, 10240
      %91 = vsyncadd [#allocation12], %s90
      %s92 = sshll.u32 [#allocation13], 4
      %s93 = int_to_ptr.vmem [resolvable:$true] %s92
      %98 = dma.hbm_to_vmem [thread:$0]  %s7, 10240, %s93, [#allocation12], 128, 128, 8
    $region33: #{tpu_custom_call.1} parent=1 // pred_fallthru
      _
    // Predicated region
    $region34: #{tpu_custom_call.1} parent=1 // pred_check
      _
    $region35: #{tpu_custom_call.1} parent=1 // pred_check_branch
      %100 = sbr.rel (0) target = $region37
    $region36: #{tpu_custom_call.1} parent=1 // pred_region
      _
    $region37: #{tpu_custom_call.1} parent=1 // pred_fallthru
      _
    // Predicated region
    $region38: #{tpu_custom_call.1} parent=1 // pred_check
      _
    $region39: #{tpu_custom_call.1} parent=1 // pred_check_branch
      %102 = sbr.rel (0) target = $region41
    $region40: #{tpu_custom_call.1} parent=1 // pred_region
      %103 = dma.done [#allocation3], 512
    $region41: #{tpu_custom_call.1} parent=1 // pred_fallthru
      _
    // Predicated region
    $region42: #{tpu_custom_call.1} parent=1 // pred_check
      _
    $region43: #{tpu_custom_call.1} parent=1 // pred_check_branch
      %105 = sbr.rel (0) target = $region45
    $region44: #{tpu_custom_call.1} parent=1 // pred_region
      %106 = dma.done [#allocation6], 12288
    $region45: #{tpu_custom_call.1} parent=1 // pred_fallthru
      _
    // Predicated region
    $region46: #{tpu_custom_call.1} parent=1 // pred_check
      _
    $region47: #{tpu_custom_call.1} parent=1 // pred_check_branch
      %108 = sbr.rel (0) target = $region49
    $region48: #{tpu_custom_call.1} parent=1 // pred_region
      %109 = dma.done [#allocation6], 192
    $region49: #{tpu_custom_call.1} parent=1 // pred_fallthru
      _
    // Predicated region
    $region50: #{tpu_custom_call.1} parent=1 // pred_check
      _
    $region51: #{tpu_custom_call.1} parent=1 // pred_check_branch
      %111 = sbr.rel (0) target = $region53
    $region52: #{tpu_custom_call.1} parent=1 // pred_region
      %112 = dma.done [#allocation9], 576
    $region53: #{tpu_custom_call.1} parent=1 // pred_fallthru
      _
    // Predicated region
    $region54: #{tpu_custom_call.1} parent=1 // pred_check
      _
    $region55: #{tpu_custom_call.1} parent=1 // pred_check_branch
      %114 = sbr.rel (0) target = $region57
    $region56: #{tpu_custom_call.1} parent=1 // pred_region
      %115 = dma.done [#allocation9], 64
    $region57: #{tpu_custom_call.1} parent=1 // pred_fallthru
      _
    // Predicated region
    $region58: #{tpu_custom_call.1} parent=1 // pred_check
      _
    $region59: #{tpu_custom_call.1} parent=1 // pred_check_branch
      %117 = sbr.rel (0) target = $region61
    $region60: #{tpu_custom_call.1} parent=1 // pred_region
      %118 = dma.done [#allocation12], 256
    $region61: #{tpu_custom_call.1} parent=1 // pred_fallthru
      _
    // Predicated region
    $region62: #{tpu_custom_call.1} parent=1 // pred_check
      _
    $region63: #{tpu_custom_call.1} parent=1 // pred_check_branch
      %120 = sbr.rel (0) target = $region65
    $region64: #{tpu_custom_call.1} parent=1 // pred_region
      %121 = dma.done [#allocation12], 10240
    $region65: #{tpu_custom_call.1} parent=1 // pred_fallthru
      _
    %v123 = vld [vmem:[#allocation2] sm:$0xff]
    %v124 = vld [vmem:[#allocation2 + $0x8] sm:$0xff]
    %v125 = vld [vmem:[#allocation2 + $0x10] sm:$0xff]
    %v126 = vld [vmem:[#allocation2 + $0x18] sm:$0xff]
    %v127 = vpack.c.bf16 %v124, %v123
    %v128 = vpack.c.bf16 %v126, %v125
    %v129 = vld [vmem:[#allocation5] sm:$0xff]
    %v130 = vld [vmem:[#allocation5 + $0x8] sm:$0xff]
    %v131 = vld [vmem:[#allocation5 + $0x10] sm:$0xff]
    %v132 = vld [vmem:[#allocation5 + $0x18] sm:$0xff]
    %v133 = vld [vmem:[#allocation5 + $0x20] sm:$0xff]
    %v134 = vld [vmem:[#allocation5 + $0x28] sm:$0xff]
    %v135 = vld [vmem:[#allocation5 + $0x30] sm:$0xff]
    %v136 = vld [vmem:[#allocation5 + $0x38] sm:$0xff]
    %v137 = vld [vmem:[#allocation5 + $0x40] sm:$0xff]
    %v138 = vld [vmem:[#allocation5 + $0x48] sm:$0xff]
    %v139 = vld [vmem:[#allocation5 + $0x50] sm:$0xff]
    %v140 = vld [vmem:[#allocation5 + $0x58] sm:$0xff]
    %v141 = vld [vmem:[#allocation5 + $0x60] sm:$0xff]
    %v142 = vld [vmem:[#allocation5 + $0x68] sm:$0xff]
    %v143 = vld [vmem:[#allocation5 + $0x70] sm:$0xff]
    %v144 = vld [vmem:[#allocation5 + $0x78] sm:$0xff]
    %v145 = vld [vmem:[#allocation5 + $0x80] sm:$0xff]
    %v146 = vld [vmem:[#allocation5 + $0x88] sm:$0xff]
    %v147 = vld [vmem:[#allocation5 + $0x90] sm:$0xff]
    %v148 = vld [vmem:[#allocation5 + $0x98] sm:$0xff]
    %v149 = vld [vmem:[#allocation5 + $0xa0] sm:$0xff]
    %v150 = vld [vmem:[#allocation5 + $0xa8] sm:$0xff]
    %v151 = vld [vmem:[#allocation5 + $0xb0] sm:$0xff]
    %v152 = vld [vmem:[#allocation5 + $0xb8] sm:$0xff]
    %v153 = vld [vmem:[#allocation5 + $0xc0] sm:$0xff]
    %v154 = vld [vmem:[#allocation5 + $0xc8] sm:$0xff]
    %v155 = vld [vmem:[#allocation5 + $0xd0] sm:$0xff]
    %v156 = vld [vmem:[#allocation5 + $0xd8] sm:$0xff]
    %v157 = vld [vmem:[#allocation5 + $0xe0] sm:$0xff]
    %v158 = vld [vmem:[#allocation5 + $0xe8] sm:$0xff]
    %v159 = vld [vmem:[#allocation5 + $0xf0] sm:$0xff]
    %v160 = vld [vmem:[#allocation5 + $0xf8] sm:$0xff]
    %v161 = vld [vmem:[#allocation5 + $0x100] sm:$0xff]
    %v162 = vld [vmem:[#allocation5 + $0x108] sm:$0xff]
    %v163 = vld [vmem:[#allocation5 + $0x110] sm:$0xff]
    %v164 = vld [vmem:[#allocation5 + $0x118] sm:$0xff]
    %v165 = vld [vmem:[#allocation5 + $0x120] sm:$0xff]
    %v166 = vld [vmem:[#allocation5 + $0x128] sm:$0xff]
    %v167 = vld [vmem:[#allocation5 + $0x130] sm:$0xff]
    %v168 = vld [vmem:[#allocation5 + $0x138] sm:$0xff]
    %v169 = vld [vmem:[#allocation5 + $0x140] sm:$0xff]
    %v170 = vld [vmem:[#allocation5 + $0x148] sm:$0xff]
    %v171 = vld [vmem:[#allocation5 + $0x150] sm:$0xff]
    %v172 = vld [vmem:[#allocation5 + $0x158] sm:$0xff]
    %v173 = vld [vmem:[#allocation5 + $0x160] sm:$0xff]
    %v174 = vld [vmem:[#allocation5 + $0x168] sm:$0xff]
    %v175 = vld [vmem:[#allocation5 + $0x170] sm:$0xff]
    %v176 = vld [vmem:[#allocation5 + $0x178] sm:$0xff]
    %v177 = vld [vmem:[#allocation5 + $0x180] sm:$0xff]
    %v178 = vld [vmem:[#allocation5 + $0x188] sm:$0xff]
    %v179 = vld [vmem:[#allocation5 + $0x190] sm:$0xff]
    %v180 = vld [vmem:[#allocation5 + $0x198] sm:$0xff]
    %v181 = vld [vmem:[#allocation5 + $0x1a0] sm:$0xff]
    %v182 = vld [vmem:[#allocation5 + $0x1a8] sm:$0xff]
    %v183 = vld [vmem:[#allocation5 + $0x1b0] sm:$0xff]
    %v184 = vld [vmem:[#allocation5 + $0x1b8] sm:$0xff]
    %v185 = vld [vmem:[#allocation5 + $0x1c0] sm:$0xff]
    %v186 = vld [vmem:[#allocation5 + $0x1c8] sm:$0xff]
    %v187 = vld [vmem:[#allocation5 + $0x1d0] sm:$0xff]
    %v188 = vld [vmem:[#allocation5 + $0x1d8] sm:$0xff]
    %v189 = vld [vmem:[#allocation5 + $0x1e0] sm:$0xff]
    %v190 = vld [vmem:[#allocation5 + $0x1e8] sm:$0xff]
    %v191 = vld [vmem:[#allocation5 + $0x1f0] sm:$0xff]
    %v192 = vld [vmem:[#allocation5 + $0x1f8] sm:$0xff]
    %v193 = vld [vmem:[#allocation5 + $0x200] sm:$0xff]
    %v194 = vld [vmem:[#allocation5 + $0x208] sm:$0xff]
    %v195 = vld [vmem:[#allocation5 + $0x210] sm:$0xff]
    %v196 = vld [vmem:[#allocation5 + $0x218] sm:$0xff]
    %v197 = vld [vmem:[#allocation5 + $0x220] sm:$0xff]
    %v198 = vld [vmem:[#allocation5 + $0x228] sm:$0xff]
    %v199 = vld [vmem:[#allocation5 + $0x230] sm:$0xff]
    %v200 = vld [vmem:[#allocation5 + $0x238] sm:$0xff]
    %v201 = vld [vmem:[#allocation5 + $0x240] sm:$0xff]
    %v202 = vld [vmem:[#allocation5 + $0x248] sm:$0xff]
    %v203 = vld [vmem:[#allocation5 + $0x250] sm:$0xff]
    %v204 = vld [vmem:[#allocation5 + $0x258] sm:$0xff]
    %v205 = vld [vmem:[#allocation5 + $0x260] sm:$0xff]
    %v206 = vld [vmem:[#allocation5 + $0x268] sm:$0xff]
    %v207 = vld [vmem:[#allocation5 + $0x270] sm:$0xff]
    %v208 = vld [vmem:[#allocation5 + $0x278] sm:$0xff]
    %v209 = vld [vmem:[#allocation5 + $0x280] sm:$0xff]
    %v210 = vld [vmem:[#allocation5 + $0x288] sm:$0xff]
    %v211 = vld [vmem:[#allocation5 + $0x290] sm:$0xff]
    %v212 = vld [vmem:[#allocation5 + $0x298] sm:$0xff]
    %v213 = vld [vmem:[#allocation5 + $0x2a0] sm:$0xff]
    %v214 = vld [vmem:[#allocation5 + $0x2a8] sm:$0xff]
    %v215 = vld [vmem:[#allocation5 + $0x2b0] sm:$0xff]
    %v216 = vld [vmem:[#allocation5 + $0x2b8] sm:$0xff]
    %v217 = vld [vmem:[#allocation5 + $0x2c0] sm:$0xff]
    %v218 = vld [vmem:[#allocation5 + $0x2c8] sm:$0xff]
    %v219 = vld [vmem:[#allocation5 + $0x2d0] sm:$0xff]
    %v220 = vld [vmem:[#allocation5 + $0x2d8] sm:$0xff]
    %v221 = vld [vmem:[#allocation5 + $0x2e0] sm:$0xff]
    %v222 = vld [vmem:[#allocation5 + $0x2e8] sm:$0xff]
    %v223 = vld [vmem:[#allocation5 + $0x2f0] sm:$0xff]
    %v224 = vld [vmem:[#allocation5 + $0x2f8] sm:$0xff]
    %v225 = vld [vmem:[#allocation7] sm:$0xff]
    %v226 = vld [vmem:[#allocation7 + $0x8] sm:$0xf]
    %v229 = vlaneseq
    %v230 = vshrl.u32 %v229, 7
    %v231 = vsub.s32 0, %v230
    %v232 = vrot.slane %v225, %v231
    %v233 = vlaneseq
    %v234 = vshrl.u32 %v233, 7
    %v235 = vsub.s32 1, %v234
    %v236 = vrot.slane %v225, %v235
    %v237 = vlaneseq
    %v238 = vshrl.u32 %v237, 7
    %v239 = vsub.s32 2, %v238
    %v240 = vrot.slane %v225, %v239
    %v241 = vlaneseq
    %v242 = vshrl.u32 %v241, 7
    %v243 = vsub.s32 3, %v242
    %v244 = vrot.slane %v225, %v243
    %v245 = vlaneseq
    %v246 = vshrl.u32 %v245, 7
    %v247 = vsub.s32 4, %v246
    %v248 = vrot.slane %v225, %v247
    %v249 = vlaneseq
    %v250 = vshrl.u32 %v249, 7
    %v251 = vsub.s32 5, %v250
    %v252 = vrot.slane %v225, %v251
    %v253 = vlaneseq
    %v254 = vshrl.u32 %v253, 7
    %v255 = vsub.s32 6, %v254
    %v256 = vrot.slane %v225, %v255
    %v257 = vlaneseq
    %v258 = vshrl.u32 %v257, 7
    %v259 = vsub.s32 7, %v258
    %v260 = vrot.slane %v225, %v259
    %v261 = vlaneseq
    %v262 = vshrl.u32 %v261, 7
    %v263 = vsub.s32 0, %v262
    %v264 = vrot.slane %v226, %v263
    %v265 = vlaneseq
    %v266 = vshrl.u32 %v265, 7
    %v267 = vsub.s32 1, %v266
    %v268 = vrot.slane %v226, %v267
    %v269 = vlaneseq
    %v270 = vshrl.u32 %v269, 7
    %v271 = vsub.s32 2, %v270
    %v272 = vrot.slane %v226, %v271
    %v273 = vlaneseq
    %v274 = vshrl.u32 %v273, 7
    %v275 = vsub.s32 3, %v274
    %v276 = vrot.slane %v226, %v275
    %v385 = vunpack.c.l.b16 %v129
    %v386 = vunpack.c.h.b16 %v129
    %v387 = vunpack.c.l.b16 %v130
    %v388 = vunpack.c.h.b16 %v130
    %v389 = vunpack.c.l.b16 %v131
    %v390 = vunpack.c.h.b16 %v131
    %v391 = vunpack.c.l.b16 %v132
    %v392 = vunpack.c.h.b16 %v132
    %v393 = vunpack.c.l.b16 %v133
    %v394 = vunpack.c.h.b16 %v133
    %v395 = vunpack.c.l.b16 %v134
    %v396 = vunpack.c.h.b16 %v134
    %v397 = vunpack.c.l.b16 %v135
    %v398 = vunpack.c.h.b16 %v135
    %v399 = vunpack.c.l.b16 %v136
    %v400 = vunpack.c.h.b16 %v136
    %v401 = vunpack.c.l.b16 %v137
    %v402 = vunpack.c.h.b16 %v137
    %v403 = vunpack.c.l.b16 %v138
    %v404 = vunpack.c.h.b16 %v138
    %v405 = vunpack.c.l.b16 %v139
    %v406 = vunpack.c.h.b16 %v139
    %v407 = vunpack.c.l.b16 %v140
    %v408 = vunpack.c.h.b16 %v140
    %v409 = vunpack.c.l.b16 %v141
    %v410 = vunpack.c.h.b16 %v141
    %v411 = vunpack.c.l.b16 %v142
    %v412 = vunpack.c.h.b16 %v142
    %v413 = vunpack.c.l.b16 %v143
    %v414 = vunpack.c.h.b16 %v143
    %v415 = vunpack.c.l.b16 %v144
    %v416 = vunpack.c.h.b16 %v144
    %v417 = vunpack.c.l.b16 %v145
    %v418 = vunpack.c.h.b16 %v145
    %v419 = vunpack.c.l.b16 %v146
    %v420 = vunpack.c.h.b16 %v146
    %v421 = vunpack.c.l.b16 %v147
    %v422 = vunpack.c.h.b16 %v147
    %v423 = vunpack.c.l.b16 %v148
    %v424 = vunpack.c.h.b16 %v148
    %v425 = vunpack.c.l.b16 %v149
    %v426 = vunpack.c.h.b16 %v149
    %v427 = vunpack.c.l.b16 %v150
    %v428 = vunpack.c.h.b16 %v150
    %v429 = vunpack.c.l.b16 %v151
    %v430 = vunpack.c.h.b16 %v151
    %v431 = vunpack.c.l.b16 %v152
    %v432 = vunpack.c.h.b16 %v152
    %v433 = vunpack.c.l.b16 %v153
    %v434 = vunpack.c.h.b16 %v153
    %v435 = vunpack.c.l.b16 %v154
    %v436 = vunpack.c.h.b16 %v154
    %v437 = vunpack.c.l.b16 %v155
    %v438 = vunpack.c.h.b16 %v155
    %v439 = vunpack.c.l.b16 %v156
    %v440 = vunpack.c.h.b16 %v156
    %v441 = vunpack.c.l.b16 %v157
    %v442 = vunpack.c.h.b16 %v157
    %v443 = vunpack.c.l.b16 %v158
    %v444 = vunpack.c.h.b16 %v158
    %v445 = vunpack.c.l.b16 %v159
    %v446 = vunpack.c.h.b16 %v159
    %v447 = vunpack.c.l.b16 %v160
    %v448 = vunpack.c.h.b16 %v160
    %v449 = vunpack.c.l.b16 %v161
    %v450 = vunpack.c.h.b16 %v161
    %v451 = vunpack.c.l.b16 %v162
    %v452 = vunpack.c.h.b16 %v162
    %v453 = vunpack.c.l.b16 %v163
    %v454 = vunpack.c.h.b16 %v163
    %v455 = vunpack.c.l.b16 %v164
    %v456 = vunpack.c.h.b16 %v164
    %v457 = vunpack.c.l.b16 %v165
    %v458 = vunpack.c.h.b16 %v165
    %v459 = vunpack.c.l.b16 %v166
    %v460 = vunpack.c.h.b16 %v166
    %v461 = vunpack.c.l.b16 %v167
    %v462 = vunpack.c.h.b16 %v167
    %v463 = vunpack.c.l.b16 %v168
    %v464 = vunpack.c.h.b16 %v168
    %v465 = vunpack.c.l.b16 %v169
    %v466 = vunpack.c.h.b16 %v169
    %v467 = vunpack.c.l.b16 %v170
    %v468 = vunpack.c.h.b16 %v170
    %v469 = vunpack.c.l.b16 %v171
    %v470 = vunpack.c.h.b16 %v171
    %v471 = vunpack.c.l.b16 %v172
    %v472 = vunpack.c.h.b16 %v172
    %v473 = vunpack.c.l.b16 %v173
    %v474 = vunpack.c.h.b16 %v173
    %v475 = vunpack.c.l.b16 %v174
    %v476 = vunpack.c.h.b16 %v174
    %v477 = vunpack.c.l.b16 %v175
    %v478 = vunpack.c.h.b16 %v175
    %v479 = vunpack.c.l.b16 %v176
    %v480 = vunpack.c.h.b16 %v176
    %v481 = vunpack.c.l.b16 %v177
    %v482 = vunpack.c.h.b16 %v177
    %v483 = vunpack.c.l.b16 %v178
    %v484 = vunpack.c.h.b16 %v178
    %v485 = vunpack.c.l.b16 %v179
    %v486 = vunpack.c.h.b16 %v179
    %v487 = vunpack.c.l.b16 %v180
    %v488 = vunpack.c.h.b16 %v180
    %v489 = vunpack.c.l.b16 %v181
    %v490 = vunpack.c.h.b16 %v181
    %v491 = vunpack.c.l.b16 %v182
    %v492 = vunpack.c.h.b16 %v182
    %v493 = vunpack.c.l.b16 %v183
    %v494 = vunpack.c.h.b16 %v183
    %v495 = vunpack.c.l.b16 %v184
    %v496 = vunpack.c.h.b16 %v184
    %v497 = vunpack.c.l.b16 %v185
    %v498 = vunpack.c.h.b16 %v185
    %v499 = vunpack.c.l.b16 %v186
    %v500 = vunpack.c.h.b16 %v186
    %v501 = vunpack.c.l.b16 %v187
    %v502 = vunpack.c.h.b16 %v187
    %v503 = vunpack.c.l.b16 %v188
    %v504 = vunpack.c.h.b16 %v188
    %v505 = vunpack.c.l.b16 %v189
    %v506 = vunpack.c.h.b16 %v189
    %v507 = vunpack.c.l.b16 %v190
    %v508 = vunpack.c.h.b16 %v190
    %v509 = vunpack.c.l.b16 %v191
    %v510 = vunpack.c.h.b16 %v191
    %v511 = vunpack.c.l.b16 %v192
    %v512 = vunpack.c.h.b16 %v192
    %v513 = vunpack.c.l.b16 %v193
    %v514 = vunpack.c.h.b16 %v193
    %v515 = vunpack.c.l.b16 %v194
    %v516 = vunpack.c.h.b16 %v194
    %v517 = vunpack.c.l.b16 %v195
    %v518 = vunpack.c.h.b16 %v195
    %v519 = vunpack.c.l.b16 %v196
    %v520 = vunpack.c.h.b16 %v196
    %v521 = vunpack.c.l.b16 %v197
    %v522 = vunpack.c.h.b16 %v197
    %v523 = vunpack.c.l.b16 %v198
    %v524 = vunpack.c.h.b16 %v198
    %v525 = vunpack.c.l.b16 %v199
    %v526 = vunpack.c.h.b16 %v199
    %v527 = vunpack.c.l.b16 %v200
    %v528 = vunpack.c.h.b16 %v200
    %v529 = vunpack.c.l.b16 %v201
    %v530 = vunpack.c.h.b16 %v201
    %v531 = vunpack.c.l.b16 %v202
    %v532 = vunpack.c.h.b16 %v202
    %v533 = vunpack.c.l.b16 %v203
    %v534 = vunpack.c.h.b16 %v203
    %v535 = vunpack.c.l.b16 %v204
    %v536 = vunpack.c.h.b16 %v204
    %v537 = vunpack.c.l.b16 %v205
    %v538 = vunpack.c.h.b16 %v205
    %v539 = vunpack.c.l.b16 %v206
    %v540 = vunpack.c.h.b16 %v206
    %v541 = vunpack.c.l.b16 %v207
    %v542 = vunpack.c.h.b16 %v207
    %v543 = vunpack.c.l.b16 %v208
    %v544 = vunpack.c.h.b16 %v208
    %v545 = vunpack.c.l.b16 %v209
    %v546 = vunpack.c.h.b16 %v209
    %v547 = vunpack.c.l.b16 %v210
    %v548 = vunpack.c.h.b16 %v210
    %v549 = vunpack.c.l.b16 %v211
    %v550 = vunpack.c.h.b16 %v211
    %v551 = vunpack.c.l.b16 %v212
    %v552 = vunpack.c.h.b16 %v212
    %v553 = vunpack.c.l.b16 %v213
    %v554 = vunpack.c.h.b16 %v213
    %v555 = vunpack.c.l.b16 %v214
    %v556 = vunpack.c.h.b16 %v214
    %v557 = vunpack.c.l.b16 %v215
    %v558 = vunpack.c.h.b16 %v215
    %v559 = vunpack.c.l.b16 %v216
    %v560 = vunpack.c.h.b16 %v216
    %v561 = vunpack.c.l.b16 %v217
    %v562 = vunpack.c.h.b16 %v217
    %v563 = vunpack.c.l.b16 %v218
    %v564 = vunpack.c.h.b16 %v218
    %v565 = vunpack.c.l.b16 %v219
    %v566 = vunpack.c.h.b16 %v219
    %v567 = vunpack.c.l.b16 %v220
    %v568 = vunpack.c.h.b16 %v220
    %v569 = vunpack.c.l.b16 %v221
    %v570 = vunpack.c.h.b16 %v221
    %v571 = vunpack.c.l.b16 %v222
    %v572 = vunpack.c.h.b16 %v222
    %v573 = vunpack.c.l.b16 %v223
    %v574 = vunpack.c.h.b16 %v223
    %v575 = vunpack.c.l.b16 %v224
    %v576 = vunpack.c.h.b16 %v224
    %v577 = vpack.c.b16 %v397, %v385
    %v578 = vpack.c.b16 %v398, %v386
    %v579 = vpack.c.b16 %v399, %v387
    %v580 = vpack.c.b16 %v400, %v388
    %v581 = vpack.c.b16 %v401, %v389
    %v582 = vpack.c.b16 %v402, %v390
    %v583 = vpack.c.b16 %v403, %v391
    %v584 = vpack.c.b16 %v404, %v392
    %v585 = vpack.c.b16 %v405, %v393
    %v586 = vpack.c.b16 %v406, %v394
    %v587 = vpack.c.b16 %v407, %v395
    %v588 = vpack.c.b16 %v408, %v396
    %v589 = vpack.c.b16 %v421, %v409
    %v590 = vpack.c.b16 %v422, %v410
    %v591 = vpack.c.b16 %v423, %v411
    %v592 = vpack.c.b16 %v424, %v412
    %v593 = vpack.c.b16 %v425, %v413
    %v594 = vpack.c.b16 %v426, %v414
    %v595 = vpack.c.b16 %v427, %v415
    %v596 = vpack.c.b16 %v428, %v416
    %v597 = vpack.c.b16 %v429, %v417
    %v598 = vpack.c.b16 %v430, %v418
    %v599 = vpack.c.b16 %v431, %v419
    %v600 = vpack.c.b16 %v432, %v420
    %v601 = vpack.c.b16 %v445, %v433
    %v602 = vpack.c.b16 %v446, %v434
    %v603 = vpack.c.b16 %v447, %v435
    %v604 = vpack.c.b16 %v448, %v436
    %v605 = vpack.c.b16 %v449, %v437
    %v606 = vpack.c.b16 %v450, %v438
    %v607 = vpack.c.b16 %v451, %v439
    %v608 = vpack.c.b16 %v452, %v440
    %v609 = vpack.c.b16 %v453, %v441
    %v610 = vpack.c.b16 %v454, %v442
    %v611 = vpack.c.b16 %v455, %v443
    %v612 = vpack.c.b16 %v456, %v444
    %v613 = vpack.c.b16 %v469, %v457
    %v614 = vpack.c.b16 %v470, %v458
    %v615 = vpack.c.b16 %v471, %v459
    %v616 = vpack.c.b16 %v472, %v460
    %v617 = vpack.c.b16 %v473, %v461
    %v618 = vpack.c.b16 %v474, %v462
    %v619 = vpack.c.b16 %v475, %v463
    %v620 = vpack.c.b16 %v476, %v464
    %v621 = vpack.c.b16 %v477, %v465
    %v622 = vpack.c.b16 %v478, %v466
    %v623 = vpack.c.b16 %v479, %v467
    %v624 = vpack.c.b16 %v480, %v468
    %v625 = vpack.c.b16 %v493, %v481
    %v626 = vpack.c.b16 %v494, %v482
    %v627 = vpack.c.b16 %v495, %v483
    %v628 = vpack.c.b16 %v496, %v484
    %v629 = vpack.c.b16 %v497, %v485
    %v630 = vpack.c.b16 %v498, %v486
    %v631 = vpack.c.b16 %v499, %v487
    %v632 = vpack.c.b16 %v500, %v488
    %v633 = vpack.c.b16 %v501, %v489
    %v634 = vpack.c.b16 %v502, %v490
    %v635 = vpack.c.b16 %v503, %v491
    %v636 = vpack.c.b16 %v504, %v492
    %v637 = vpack.c.b16 %v517, %v505
    %v638 = vpack.c.b16 %v518, %v506
    %v639 = vpack.c.b16 %v519, %v507
    %v640 = vpack.c.b16 %v520, %v508
    %v641 = vpack.c.b16 %v521, %v509
    %v642 = vpack.c.b16 %v522, %v510
    %v643 = vpack.c.b16 %v523, %v511
    %v644 = vpack.c.b16 %v524, %v512
    %v645 = vpack.c.b16 %v525, %v513
    %v646 = vpack.c.b16 %v526, %v514
    %v647 = vpack.c.b16 %v527, %v515
    %v648 = vpack.c.b16 %v528, %v516
    %v649 = vpack.c.b16 %v541, %v529
    %v650 = vpack.c.b16 %v542, %v530
    %v651 = vpack.c.b16 %v543, %v531
    %v652 = vpack.c.b16 %v544, %v532
    %v653 = vpack.c.b16 %v545, %v533
    %v654 = vpack.c.b16 %v546, %v534
    %v655 = vpack.c.b16 %v547, %v535
    %v656 = vpack.c.b16 %v548, %v536
    %v657 = vpack.c.b16 %v549, %v537
    %v658 = vpack.c.b16 %v550, %v538
    %v659 = vpack.c.b16 %v551, %v539
    %v660 = vpack.c.b16 %v552, %v540
    %v661 = vpack.c.b16 %v565, %v553
    %v662 = vpack.c.b16 %v566, %v554
    %v663 = vpack.c.b16 %v567, %v555
    %v664 = vpack.c.b16 %v568, %v556
    %v665 = vpack.c.b16 %v569, %v557
    %v666 = vpack.c.b16 %v570, %v558
    %v667 = vpack.c.b16 %v571, %v559
    %v668 = vpack.c.b16 %v572, %v560
    %v669 = vpack.c.b16 %v573, %v561
    %v670 = vpack.c.b16 %v574, %v562
    %v671 = vpack.c.b16 %v575, %v563
    %v672 = vpack.c.b16 %v576, %v564
    %769 = vmatprep.subr.bf16.mxu0 %v578
    %770 = vmatpush1.bf16.msra.mxu0 %v577
    %771 = vmatprep.subr.bf16.mxu0 %v590
    %772 = vmatpush1.bf16.msra.mxu0 %v589
    %773 = vmatprep.subr.bf16.mxu0 %v602
    %774 = vmatpush1.bf16.msra.mxu0 %v601
    %775 = vmatprep.subr.bf16.mxu0 %v614
    %776 = vmatpush1.bf16.msra.mxu0 %v613
    %777 = vmatprep.subr.bf16.mxu0 %v626
    %778 = vmatpush1.bf16.msra.mxu0 %v625
    %779 = vmatprep.subr.bf16.mxu0 %v638
    %780 = vmatpush1.bf16.msra.mxu0 %v637
    %781 = vmatprep.subr.bf16.mxu0 %v650
    %782 = vmatpush1.bf16.msra.mxu0 %v649
    %783 = vmatprep.subr.bf16.mxu0 %v662
    %784 = vmatpush1.bf16.msra.mxu0 %v661
    %785 = vmatprep.subr.bf16.mxu0 0
    %786 = vmatpush1.bf16.msra.mxu0 0
    %787 = vmatprep.subr.bf16.mxu0 0
    %788 = vmatpush1.bf16.msra.mxu0 0
    %789 = vmatprep.subr.bf16.mxu0 0
    %790 = vmatpush1.bf16.msra.mxu0 0
    %791 = vmatprep.subr.bf16.mxu0 0
    %792 = vmatpush1.bf16.msra.mxu0 0
    %793 = vmatprep.subr.bf16.mxu0 0
    %794 = vmatpush1.bf16.msra.mxu0 0
    %795 = vmatprep.subr.bf16.mxu0 0
    %796 = vmatpush1.bf16.msra.mxu0 0
    %797 = vmatprep.subr.bf16.mxu0 0
    %798 = vmatpush1.bf16.msra.mxu0 0
    %799 = vmatprep.subr.bf16.mxu0 0
    %800 = vmatpush1.bf16.msra.mxu0 0
    %801 = vmatprep.mubr.bf16.mxu0 0
    %802 = vmatmul.mubr.bf16.gmra.mrb[0].mxu0 %v127
    %v803 = vpop.f32.mrb[0].mxu0
    %v804 = vadd.f32 %v232, %v803
    %v805 = vpop.f32.mrb[0].mxu0
    %v806 = vadd.f32 %v236, %v805
    %v807 = vpop.f32.mrb[0].mxu0
    %v808 = vadd.f32 %v232, %v807
    %v809 = vpop.f32.mrb[0].mxu0
    %v810 = vadd.f32 %v236, %v809
    %811 = vmatprep.mubr.bf16.mxu0 0
    %812 = vmatmul.mubr.bf16.gmra.mrb[0].mxu0 %v128
    %v813 = vpop.f32.mrb[0].mxu0
    %v814 = vadd.f32 %v232, %v813
    %v815 = vpop.f32.mrb[0].mxu0
    %v816 = vadd.f32 %v236, %v815
    %v817 = vpop.f32.mrb[0].mxu0
    %v818 = vadd.f32 %v232, %v817
    %v819 = vpop.f32.mrb[0].mxu0
    %v820 = vadd.f32 %v236, %v819
    %821 = vdwg.mxu0
    %822 = vmatprep.subr.bf16.mxu0 %v580
    %823 = vmatpush1.bf16.msra.mxu0 %v579
    %824 = vmatprep.subr.bf16.mxu0 %v592
    %825 = vmatpush1.bf16.msra.mxu0 %v591
    %826 = vmatprep.subr.bf16.mxu0 %v604
    %827 = vmatpush1.bf16.msra.mxu0 %v603
    %828 = vmatprep.subr.bf16.mxu0 %v616
    %829 = vmatpush1.bf16.msra.mxu0 %v615
    %830 = vmatprep.subr.bf16.mxu0 %v628
    %831 = vmatpush1.bf16.msra.mxu0 %v627
    %832 = vmatprep.subr.bf16.mxu0 %v640
    %833 = vmatpush1.bf16.msra.mxu0 %v639
    %834 = vmatprep.subr.bf16.mxu0 %v652
    %835 = vmatpush1.bf16.msra.mxu0 %v651
    %836 = vmatprep.subr.bf16.mxu0 %v664
    %837 = vmatpush1.bf16.msra.mxu0 %v663
    %838 = vmatprep.subr.bf16.mxu0 0
    %839 = vmatpush1.bf16.msra.mxu0 0
    %840 = vmatprep.subr.bf16.mxu0 0
    %841 = vmatpush1.bf16.msra.mxu0 0
    %842 = vmatprep.subr.bf16.mxu0 0
    %843 = vmatpush1.bf16.msra.mxu0 0
    %844 = vmatprep.subr.bf16.mxu0 0
    %845 = vmatpush1.bf16.msra.mxu0 0
    %846 = vmatprep.subr.bf16.mxu0 0
    %847 = vmatpush1.bf16.msra.mxu0 0
    %848 = vmatprep.subr.bf16.mxu0 0
    %849 = vmatpush1.bf16.msra.mxu0 0
    %850 = vmatprep.subr.bf16.mxu0 0
    %851 = vmatpush1.bf16.msra.mxu0 0
    %852 = vmatprep.subr.bf16.mxu0 0
    %853 = vmatpush1.bf16.msra.mxu0 0
    %854 = vmatprep.mubr.bf16.mxu0 0
    %855 = vmatmul.mubr.bf16.gmra.mrb[0].mxu0 %v127
    %v856 = vpop.f32.mrb[0].mxu0
    %v857 = vadd.f32 %v240, %v856
    %v858 = vpop.f32.mrb[0].mxu0
    %v859 = vadd.f32 %v244, %v858
    %v860 = vpop.f32.mrb[0].mxu0
    %v861 = vadd.f32 %v240, %v860
    %v862 = vpop.f32.mrb[0].mxu0
    %v863 = vadd.f32 %v244, %v862
    %864 = vmatprep.mubr.bf16.mxu0 0
    %865 = vmatmul.mubr.bf16.gmra.mrb[0].mxu0 %v128
    %v866 = vpop.f32.mrb[0].mxu0
    %v867 = vadd.f32 %v240, %v866
    %v868 = vpop.f32.mrb[0].mxu0
    %v869 = vadd.f32 %v244, %v868
    %v870 = vpop.f32.mrb[0].mxu0
    %v871 = vadd.f32 %v240, %v870
    %v872 = vpop.f32.mrb[0].mxu0
    %v873 = vadd.f32 %v244, %v872
    %874 = vdwg.mxu0
    %875 = vmatprep.subr.bf16.mxu0 %v582
    %876 = vmatpush1.bf16.msra.mxu0 %v581
    %877 = vmatprep.subr.bf16.mxu0 %v594
    %878 = vmatpush1.bf16.msra.mxu0 %v593
    %879 = vmatprep.subr.bf16.mxu0 %v606
    %880 = vmatpush1.bf16.msra.mxu0 %v605
    %881 = vmatprep.subr.bf16.mxu0 %v618
    %882 = vmatpush1.bf16.msra.mxu0 %v617
    %883 = vmatprep.subr.bf16.mxu0 %v630
    %884 = vmatpush1.bf16.msra.mxu0 %v629
    %885 = vmatprep.subr.bf16.mxu0 %v642
    %886 = vmatpush1.bf16.msra.mxu0 %v641
    %887 = vmatprep.subr.bf16.mxu0 %v654
    %888 = vmatpush1.bf16.msra.mxu0 %v653
    %889 = vmatprep.subr.bf16.mxu0 %v666
    %890 = vmatpush1.bf16.msra.mxu0 %v665
    %891 = vmatprep.subr.bf16.mxu0 0
    %892 = vmatpush1.bf16.msra.mxu0 0
    %893 = vmatprep.subr.bf16.mxu0 0
    %894 = vmatpush1.bf16.msra.mxu0 0
    %895 = vmatprep.subr.bf16.mxu0 0
    %896 = vmatpush1.bf16.msra.mxu0 0
    %897 = vmatprep.subr.bf16.mxu0 0
    %898 = vmatpush1.bf16.msra.mxu0 0
    %899 = vmatprep.subr.bf16.mxu0 0
    %900 = vmatpush1.bf16.msra.mxu0 0
    %901 = vmatprep.subr.bf16.mxu0 0
    %902 = vmatpush1.bf16.msra.mxu0 0
    %903 = vmatprep.subr.bf16.mxu0 0
    %904 = vmatpush1.bf16.msra.mxu0 0
    %905 = vmatprep.subr.bf16.mxu0 0
    %906 = vmatpush1.bf16.msra.mxu0 0
    %907 = vmatprep.mubr.bf16.mxu0 0
    %908 = vmatmul.mubr.bf16.gmra.mrb[0].mxu0 %v127
    %v909 = vpop.f32.mrb[0].mxu0
    %v910 = vadd.f32 %v248, %v909
    %v911 = vpop.f32.mrb[0].mxu0
    %v912 = vadd.f32 %v252, %v911
    %v913 = vpop.f32.mrb[0].mxu0
    %v914 = vadd.f32 %v248, %v913
    %v915 = vpop.f32.mrb[0].mxu0
    %v916 = vadd.f32 %v252, %v915
    %917 = vmatprep.mubr.bf16.mxu0 0
    %918 = vmatmul.mubr.bf16.gmra.mrb[0].mxu0 %v128
    %v919 = vpop.f32.mrb[0].mxu0
    %v920 = vadd.f32 %v248, %v919
    %v921 = vpop.f32.mrb[0].mxu0
    %v922 = vadd.f32 %v252, %v921
    %v923 = vpop.f32.mrb[0].mxu0
    %v924 = vadd.f32 %v248, %v923
    %v925 = vpop.f32.mrb[0].mxu0
    %v926 = vadd.f32 %v252, %v925
    %927 = vdwg.mxu0
    %928 = vmatprep.subr.bf16.mxu0 %v584
    %929 = vmatpush1.bf16.msra.mxu0 %v583
    %930 = vmatprep.subr.bf16.mxu0 %v596
    %931 = vmatpush1.bf16.msra.mxu0 %v595
    %932 = vmatprep.subr.bf16.mxu0 %v608
    %933 = vmatpush1.bf16.msra.mxu0 %v607
    %934 = vmatprep.subr.bf16.mxu0 %v620
    %935 = vmatpush1.bf16.msra.mxu0 %v619
    %936 = vmatprep.subr.bf16.mxu0 %v632
    %937 = vmatpush1.bf16.msra.mxu0 %v631
    %938 = vmatprep.subr.bf16.mxu0 %v644
    %939 = vmatpush1.bf16.msra.mxu0 %v643
    %940 = vmatprep.subr.bf16.mxu0 %v656
    %941 = vmatpush1.bf16.msra.mxu0 %v655
    %942 = vmatprep.subr.bf16.mxu0 %v668
    %943 = vmatpush1.bf16.msra.mxu0 %v667
    %944 = vmatprep.subr.bf16.mxu0 0
    %945 = vmatpush1.bf16.msra.mxu0 0
    %946 = vmatprep.subr.bf16.mxu0 0
    %947 = vmatpush1.bf16.msra.mxu0 0
    %948 = vmatprep.subr.bf16.mxu0 0
    %949 = vmatpush1.bf16.msra.mxu0 0
    %950 = vmatprep.subr.bf16.mxu0 0
    %951 = vmatpush1.bf16.msra.mxu0 0
    %952 = vmatprep.subr.bf16.mxu0 0
    %953 = vmatpush1.bf16.msra.mxu0 0
    %954 = vmatprep.subr.bf16.mxu0 0
    %955 = vmatpush1.bf16.msra.mxu0 0
    %956 = vmatprep.subr.bf16.mxu0 0
    %957 = vmatpush1.bf16.msra.mxu0 0
    %958 = vmatprep.subr.bf16.mxu0 0
    %959 = vmatpush1.bf16.msra.mxu0 0
    %960 = vmatprep.mubr.bf16.mxu0 0
    %961 = vmatmul.mubr.bf16.gmra.mrb[0].mxu0 %v127
    %v962 = vpop.f32.mrb[0].mxu0
    %v963 = vadd.f32 %v256, %v962
    %v964 = vpop.f32.mrb[0].mxu0
    %v965 = vadd.f32 %v260, %v964
    %v966 = vpop.f32.mrb[0].mxu0
    %v967 = vadd.f32 %v256, %v966
    %v968 = vpop.f32.mrb[0].mxu0
    %v969 = vadd.f32 %v260, %v968
    %970 = vmatprep.mubr.bf16.mxu0 0
    %971 = vmatmul.mubr.bf16.gmra.mrb[0].mxu0 %v128
    %v972 = vpop.f32.mrb[0].mxu0
    %v973 = vadd.f32 %v256, %v972
    %v974 = vpop.f32.mrb[0].mxu0
    %v975 = vadd.f32 %v260, %v974
    %v976 = vpop.f32.mrb[0].mxu0
    %v977 = vadd.f32 %v256, %v976
    %v978 = vpop.f32.mrb[0].mxu0
    %v979 = vadd.f32 %v260, %v978
    %980 = vdwg.mxu0
    %981 = vmatprep.subr.bf16.mxu0 %v586
    %982 = vmatpush1.bf16.msra.mxu0 %v585
    %983 = vmatprep.subr.bf16.mxu0 %v598
    %984 = vmatpush1.bf16.msra.mxu0 %v597
    %985 = vmatprep.subr.bf16.mxu0 %v610
    %986 = vmatpush1.bf16.msra.mxu0 %v609
    %987 = vmatprep.subr.bf16.mxu0 %v622
    %988 = vmatpush1.bf16.msra.mxu0 %v621
    %989 = vmatprep.subr.bf16.mxu0 %v634
    %990 = vmatpush1.bf16.msra.mxu0 %v633
    %991 = vmatprep.subr.bf16.mxu0 %v646
    %992 = vmatpush1.bf16.msra.mxu0 %v645
    %993 = vmatprep.subr.bf16.mxu0 %v658
    %994 = vmatpush1.bf16.msra.mxu0 %v657
    %995 = vmatprep.subr.bf16.mxu0 %v670
    %996 = vmatpush1.bf16.msra.mxu0 %v669
    %997 = vmatprep.subr.bf16.mxu0 0
    %998 = vmatpush1.bf16.msra.mxu0 0
    %999 = vmatprep.subr.bf16.mxu0 0
    %1000 = vmatpush1.bf16.msra.mxu0 0
    %1001 = vmatprep.subr.bf16.mxu0 0
    %1002 = vmatpush1.bf16.msra.mxu0 0
    %1003 = vmatprep.subr.bf16.mxu0 0
    %1004 = vmatpush1.bf16.msra.mxu0 0
    %1005 = vmatprep.subr.bf16.mxu0 0
    %1006 = vmatpush1.bf16.msra.mxu0 0
    %1007 = vmatprep.subr.bf16.mxu0 0
    %1008 = vmatpush1.bf16.msra.mxu0 0
    %1009 = vmatprep.subr.bf16.mxu0 0
    %1010 = vmatpush1.bf16.msra.mxu0 0
    %1011 = vmatprep.subr.bf16.mxu0 0
    %1012 = vmatpush1.bf16.msra.mxu0 0
    %1013 = vmatprep.mubr.bf16.mxu0 0
    %1014 = vmatmul.mubr.bf16.gmra.mrb[0].mxu0 %v127
    %v1015 = vpop.f32.mrb[0].mxu0
    %v1016 = vadd.f32 %v264, %v1015
    %v1017 = vpop.f32.mrb[0].mxu0
    %v1018 = vadd.f32 %v268, %v1017
    %v1019 = vpop.f32.mrb[0].mxu0
    %v1020 = vadd.f32 %v264, %v1019
    %v1021 = vpop.f32.mrb[0].mxu0
    %v1022 = vadd.f32 %v268, %v1021
    %1023 = vmatprep.mubr.bf16.mxu0 0
    %1024 = vmatmul.mubr.bf16.gmra.mrb[0].mxu0 %v128
    %v1025 = vpop.f32.mrb[0].mxu0
    %v1026 = vadd.f32 %v264, %v1025
    %v1027 = vpop.f32.mrb[0].mxu0
    %v1028 = vadd.f32 %v268, %v1027
    %v1029 = vpop.f32.mrb[0].mxu0
    %v1030 = vadd.f32 %v264, %v1029
    %v1031 = vpop.f32.mrb[0].mxu0
    %v1032 = vadd.f32 %v268, %v1031
    %1033 = vdwg.mxu0
    %1034 = vmatprep.subr.bf16.mxu0 %v588
    %1035 = vmatpush1.bf16.msra.mxu0 %v587
    %1036 = vmatprep.subr.bf16.mxu0 %v600
    %1037 = vmatpush1.bf16.msra.mxu0 %v599
    %1038 = vmatprep.subr.bf16.mxu0 %v612
    %1039 = vmatpush1.bf16.msra.mxu0 %v611
    %1040 = vmatprep.subr.bf16.mxu0 %v624
    %1041 = vmatpush1.bf16.msra.mxu0 %v623
    %1042 = vmatprep.subr.bf16.mxu0 %v636
    %1043 = vmatpush1.bf16.msra.mxu0 %v635
    %1044 = vmatprep.subr.bf16.mxu0 %v648
    %1045 = vmatpush1.bf16.msra.mxu0 %v647
    %1046 = vmatprep.subr.bf16.mxu0 %v660
    %1047 = vmatpush1.bf16.msra.mxu0 %v659
    %1048 = vmatprep.subr.bf16.mxu0 %v672
    %1049 = vmatpush1.bf16.msra.mxu0 %v671
    %1050 = vmatprep.subr.bf16.mxu0 0
    %1051 = vmatpush1.bf16.msra.mxu0 0
    %1052 = vmatprep.subr.bf16.mxu0 0
    %1053 = vmatpush1.bf16.msra.mxu0 0
    %1054 = vmatprep.subr.bf16.mxu0 0
    %1055 = vmatpush1.bf16.msra.mxu0 0
    %1056 = vmatprep.subr.bf16.mxu0 0
    %1057 = vmatpush1.bf16.msra.mxu0 0
    %1058 = vmatprep.subr.bf16.mxu0 0
    %1059 = vmatpush1.bf16.msra.mxu0 0
    %1060 = vmatprep.subr.bf16.mxu0 0
    %1061 = vmatpush1.bf16.msra.mxu0 0
    %1062 = vmatprep.subr.bf16.mxu0 0
    %1063 = vmatpush1.bf16.msra.mxu0 0
    %1064 = vmatprep.subr.bf16.mxu0 0
    %1065 = vmatpush1.bf16.msra.mxu0 0
    %1066 = vmatprep.mubr.bf16.mxu0 0
    %1067 = vmatmul.mubr.bf16.gmra.mrb[0].mxu0 %v127
    %v1068 = vpop.f32.mrb[0].mxu0
    %v1069 = vadd.f32 %v272, %v1068
    %v1070 = vpop.f32.mrb[0].mxu0
    %v1071 = vadd.f32 %v276, %v1070
    %v1072 = vpop.f32.mrb[0].mxu0
    %v1073 = vadd.f32 %v272, %v1072
    %v1074 = vpop.f32.mrb[0].mxu0
    %v1075 = vadd.f32 %v276, %v1074
    %1076 = vmatprep.mubr.bf16.mxu0 0
    %1077 = vmatmul.mubr.bf16.gmra.mrb[0].mxu0 %v128
    %v1078 = vpop.f32.mrb[0].mxu0
    %v1079 = vadd.f32 %v272, %v1078
    %v1080 = vpop.f32.mrb[0].mxu0
    %v1081 = vadd.f32 %v276, %v1080
    %v1082 = vpop.f32.mrb[0].mxu0
    %v1083 = vadd.f32 %v272, %v1082
    %v1084 = vpop.f32.mrb[0].mxu0
    %v1085 = vadd.f32 %v276, %v1084
    %1086 = vdwg.mxu0
    %v1087 = vmax.f32 %v804, 0.0
    %v1088 = vmax.f32 %v806, 0.0
    %v1089 = vmax.f32 %v857, 0.0
    %v1090 = vmax.f32 %v859, 0.0
    %v1091 = vmax.f32 %v910, 0.0
    %v1092 = vmax.f32 %v912, 0.0
    %v1093 = vmax.f32 %v963, 0.0
    %v1094 = vmax.f32 %v965, 0.0
    %v1095 = vmax.f32 %v1016, 0.0
    %v1096 = vmax.f32 %v1018, 0.0
    %v1097 = vmax.f32 %v1069, 0.0
    %v1098 = vmax.f32 %v1071, 0.0
    %v1099 = vmax.f32 %v808, 0.0
    %v1100 = vmax.f32 %v810, 0.0
    %v1101 = vmax.f32 %v861, 0.0
    %v1102 = vmax.f32 %v863, 0.0
    %v1103 = vmax.f32 %v914, 0.0
    %v1104 = vmax.f32 %v916, 0.0
    %v1105 = vmax.f32 %v967, 0.0
    %v1106 = vmax.f32 %v969, 0.0
    %v1107 = vmax.f32 %v1020, 0.0
    %v1108 = vmax.f32 %v1022, 0.0
    %v1109 = vmax.f32 %v1073, 0.0
    %v1110 = vmax.f32 %v1075, 0.0
    %v1111 = vmax.f32 %v814, 0.0
    %v1112 = vmax.f32 %v816, 0.0
    %v1113 = vmax.f32 %v867, 0.0
    %v1114 = vmax.f32 %v869, 0.0
    %v1115 = vmax.f32 %v920, 0.0
    %v1116 = vmax.f32 %v922, 0.0
    %v1117 = vmax.f32 %v973, 0.0
    %v1118 = vmax.f32 %v975, 0.0
    %v1119 = vmax.f32 %v1026, 0.0
    %v1120 = vmax.f32 %v1028, 0.0
    %v1121 = vmax.f32 %v1079, 0.0
    %v1122 = vmax.f32 %v1081, 0.0
    %v1123 = vmax.f32 %v818, 0.0
    %v1124 = vmax.f32 %v820, 0.0
    %v1125 = vmax.f32 %v871, 0.0
    %v1126 = vmax.f32 %v873, 0.0
    %v1127 = vmax.f32 %v924, 0.0
    %v1128 = vmax.f32 %v926, 0.0
    %v1129 = vmax.f32 %v977, 0.0
    %v1130 = vmax.f32 %v979, 0.0
    %v1131 = vmax.f32 %v1030, 0.0
    %v1132 = vmax.f32 %v1032, 0.0
    %v1133 = vmax.f32 %v1083, 0.0
    %v1134 = vmax.f32 %v1085, 0.0
    %v1135 = vld [vmem:[#allocation8] sm:$0xf]
    %v1137 = vlaneseq
    %v1138 = vshrl.u32 %v1137, 7
    %v1139 = vsub.s32 0, %v1138
    %v1140 = vrot.slane %v1135, %v1139
    %v1141 = vlaneseq
    %v1142 = vshrl.u32 %v1141, 7
    %v1143 = vsub.s32 1, %v1142
    %v1144 = vrot.slane %v1135, %v1143
    %v1145 = vlaneseq
    %v1146 = vshrl.u32 %v1145, 7
    %v1147 = vsub.s32 2, %v1146
    %v1148 = vrot.slane %v1135, %v1147
    %v1149 = vlaneseq
    %v1150 = vshrl.u32 %v1149, 7
    %v1151 = vsub.s32 3, %v1150
    %v1152 = vrot.slane %v1135, %v1151
    %v1157 = vmul.f32 %v1091, %v1140
    %v1158 = vmul.f32 %v1092, %v1144
    %v1159 = vmul.f32 %v1093, %v1148
    %v1160 = vmul.f32 %v1094, %v1152
    %v1161 = vmul.f32 %v1103, %v1140
    %v1162 = vmul.f32 %v1104, %v1144
    %v1163 = vmul.f32 %v1105, %v1148
    %v1164 = vmul.f32 %v1106, %v1152
    %v1165 = vmul.f32 %v1115, %v1140
    %v1166 = vmul.f32 %v1116, %v1144
    %v1167 = vmul.f32 %v1117, %v1148
    %v1168 = vmul.f32 %v1118, %v1152
    %v1169 = vmul.f32 %v1127, %v1140
    %v1170 = vmul.f32 %v1128, %v1144
    %v1171 = vmul.f32 %v1129, %v1148
    %v1172 = vmul.f32 %v1130, %v1152
    %v1173 = vld [vmem:[#allocation8 + $0x4] sm:$0xf]
    %v1175 = vlaneseq
    %v1176 = vshrl.u32 %v1175, 7
    %v1177 = vsub.s32 0, %v1176
    %v1178 = vrot.slane %v1173, %v1177
    %v1179 = vlaneseq
    %v1180 = vshrl.u32 %v1179, 7
    %v1181 = vsub.s32 1, %v1180
    %v1182 = vrot.slane %v1173, %v1181
    %v1183 = vlaneseq
    %v1184 = vshrl.u32 %v1183, 7
    %v1185 = vsub.s32 2, %v1184
    %v1186 = vrot.slane %v1173, %v1185
    %v1187 = vlaneseq
    %v1188 = vshrl.u32 %v1187, 7
    %v1189 = vsub.s32 3, %v1188
    %v1190 = vrot.slane %v1173, %v1189
    %v1195 = vmul.f32 %v1087, %v1178
    %v1196 = vmul.f32 %v1088, %v1182
    %v1197 = vmul.f32 %v1089, %v1186
    %v1198 = vmul.f32 %v1090, %v1190
    %v1199 = vmul.f32 %v1099, %v1178
    %v1200 = vmul.f32 %v1100, %v1182
    %v1201 = vmul.f32 %v1101, %v1186
    %v1202 = vmul.f32 %v1102, %v1190
    %v1203 = vmul.f32 %v1111, %v1178
    %v1204 = vmul.f32 %v1112, %v1182
    %v1205 = vmul.f32 %v1113, %v1186
    %v1206 = vmul.f32 %v1114, %v1190
    %v1207 = vmul.f32 %v1123, %v1178
    %v1208 = vmul.f32 %v1124, %v1182
    %v1209 = vmul.f32 %v1125, %v1186
    %v1210 = vmul.f32 %v1126, %v1190
    %v1211 = vadd.f32 %v1157, %v1195
    %v1212 = vadd.f32 %v1158, %v1196
    %v1213 = vadd.f32 %v1159, %v1197
    %v1214 = vadd.f32 %v1160, %v1198
    %v1215 = vadd.f32 %v1161, %v1199
    %v1216 = vadd.f32 %v1162, %v1200
    %v1217 = vadd.f32 %v1163, %v1201
    %v1218 = vadd.f32 %v1164, %v1202
    %v1219 = vadd.f32 %v1165, %v1203
    %v1220 = vadd.f32 %v1166, %v1204
    %v1221 = vadd.f32 %v1167, %v1205
    %v1222 = vadd.f32 %v1168, %v1206
    %v1223 = vadd.f32 %v1169, %v1207
    %v1224 = vadd.f32 %v1170, %v1208
    %v1225 = vadd.f32 %v1171, %v1209
    %v1226 = vadd.f32 %v1172, %v1210
    %v1227 = vld [vmem:[#allocation8 + $0x8] sm:$0xf]
    %v1229 = vlaneseq
    %v1230 = vshrl.u32 %v1229, 7
    %v1231 = vsub.s32 0, %v1230
    %v1232 = vrot.slane %v1227, %v1231
    %v1233 = vlaneseq
    %v1234 = vshrl.u32 %v1233, 7
    %v1235 = vsub.s32 1, %v1234
    %v1236 = vrot.slane %v1227, %v1235
    %v1237 = vlaneseq
    %v1238 = vshrl.u32 %v1237, 7
    %v1239 = vsub.s32 2, %v1238
    %v1240 = vrot.slane %v1227, %v1239
    %v1241 = vlaneseq
    %v1242 = vshrl.u32 %v1241, 7
    %v1243 = vsub.s32 3, %v1242
    %v1244 = vrot.slane %v1227, %v1243
    %v1249 = vmul.f32 %v1095, %v1232
    %v1250 = vmul.f32 %v1096, %v1236
    %v1251 = vmul.f32 %v1097, %v1240
    %v1252 = vmul.f32 %v1098, %v1244
    %v1253 = vmul.f32 %v1107, %v1232
    %v1254 = vmul.f32 %v1108, %v1236
    %v1255 = vmul.f32 %v1109, %v1240
    %v1256 = vmul.f32 %v1110, %v1244
    %v1257 = vmul.f32 %v1119, %v1232
    %v1258 = vmul.f32 %v1120, %v1236
    %v1259 = vmul.f32 %v1121, %v1240
    %v1260 = vmul.f32 %v1122, %v1244
    %v1261 = vmul.f32 %v1131, %v1232
    %v1262 = vmul.f32 %v1132, %v1236
    %v1263 = vmul.f32 %v1133, %v1240
    %v1264 = vmul.f32 %v1134, %v1244
    %v1265 = vadd.f32 %v1211, %v1249
    %v1266 = vadd.f32 %v1212, %v1250
    %v1267 = vadd.f32 %v1213, %v1251
    %v1268 = vadd.f32 %v1214, %v1252
    %v1269 = vadd.f32 %v1215, %v1253
    %v1270 = vadd.f32 %v1216, %v1254
    %v1271 = vadd.f32 %v1217, %v1255
    %v1272 = vadd.f32 %v1218, %v1256
    %v1273 = vadd.f32 %v1219, %v1257
    %v1274 = vadd.f32 %v1220, %v1258
    %v1275 = vadd.f32 %v1221, %v1259
    %v1276 = vadd.f32 %v1222, %v1260
    %v1277 = vadd.f32 %v1223, %v1261
    %v1278 = vadd.f32 %v1224, %v1262
    %v1279 = vadd.f32 %v1225, %v1263
    %v1280 = vadd.f32 %v1226, %v1264
    %v1281 = vld [vmem:[#allocation8 + $0xc] sm:$0xf]
    %v1283 = vlaneseq
    %v1284 = vshrl.u32 %v1283, 7
    %v1285 = vsub.s32 0, %v1284
    %v1286 = vrot.slane %v1281, %v1285
    %v1287 = vlaneseq
    %v1288 = vshrl.u32 %v1287, 7
    %v1289 = vsub.s32 1, %v1288
    %v1290 = vrot.slane %v1281, %v1289
    %v1291 = vlaneseq
    %v1292 = vshrl.u32 %v1291, 7
    %v1293 = vsub.s32 2, %v1292
    %v1294 = vrot.slane %v1281, %v1293
    %v1295 = vlaneseq
    %v1296 = vshrl.u32 %v1295, 7
    %v1297 = vsub.s32 3, %v1296
    %v1298 = vrot.slane %v1281, %v1297
    %v1303 = vmul.f32 %v1091, %v1286
    %v1304 = vmul.f32 %v1092, %v1290
    %v1305 = vmul.f32 %v1093, %v1294
    %v1306 = vmul.f32 %v1094, %v1298
    %v1307 = vmul.f32 %v1103, %v1286
    %v1308 = vmul.f32 %v1104, %v1290
    %v1309 = vmul.f32 %v1105, %v1294
    %v1310 = vmul.f32 %v1106, %v1298
    %v1311 = vmul.f32 %v1115, %v1286
    %v1312 = vmul.f32 %v1116, %v1290
    %v1313 = vmul.f32 %v1117, %v1294
    %v1314 = vmul.f32 %v1118, %v1298
    %v1315 = vmul.f32 %v1127, %v1286
    %v1316 = vmul.f32 %v1128, %v1290
    %v1317 = vmul.f32 %v1129, %v1294
    %v1318 = vmul.f32 %v1130, %v1298
    %v1319 = vld [vmem:[#allocation8 + $0x10] sm:$0xf]
    %v1321 = vlaneseq
    %v1322 = vshrl.u32 %v1321, 7
    %v1323 = vsub.s32 0, %v1322
    %v1324 = vrot.slane %v1319, %v1323
    %v1325 = vlaneseq
    %v1326 = vshrl.u32 %v1325, 7
    %v1327 = vsub.s32 1, %v1326
    %v1328 = vrot.slane %v1319, %v1327
    %v1329 = vlaneseq
    %v1330 = vshrl.u32 %v1329, 7
    %v1331 = vsub.s32 2, %v1330
    %v1332 = vrot.slane %v1319, %v1331
    %v1333 = vlaneseq
    %v1334 = vshrl.u32 %v1333, 7
    %v1335 = vsub.s32 3, %v1334
    %v1336 = vrot.slane %v1319, %v1335
    %v1341 = vmul.f32 %v1087, %v1324
    %v1342 = vmul.f32 %v1088, %v1328
    %v1343 = vmul.f32 %v1089, %v1332
    %v1344 = vmul.f32 %v1090, %v1336
    %v1345 = vmul.f32 %v1099, %v1324
    %v1346 = vmul.f32 %v1100, %v1328
    %v1347 = vmul.f32 %v1101, %v1332
    %v1348 = vmul.f32 %v1102, %v1336
    %v1349 = vmul.f32 %v1111, %v1324
    %v1350 = vmul.f32 %v1112, %v1328
    %v1351 = vmul.f32 %v1113, %v1332
    %v1352 = vmul.f32 %v1114, %v1336
    %v1353 = vmul.f32 %v1123, %v1324
    %v1354 = vmul.f32 %v1124, %v1328
    %v1355 = vmul.f32 %v1125, %v1332
    %v1356 = vmul.f32 %v1126, %v1336
    %v1357 = vadd.f32 %v1303, %v1341
    %v1358 = vadd.f32 %v1304, %v1342
    %v1359 = vadd.f32 %v1305, %v1343
    %v1360 = vadd.f32 %v1306, %v1344
    %v1361 = vadd.f32 %v1307, %v1345
    %v1362 = vadd.f32 %v1308, %v1346
    %v1363 = vadd.f32 %v1309, %v1347
    %v1364 = vadd.f32 %v1310, %v1348
    %v1365 = vadd.f32 %v1311, %v1349
    %v1366 = vadd.f32 %v1312, %v1350
    %v1367 = vadd.f32 %v1313, %v1351
    %v1368 = vadd.f32 %v1314, %v1352
    %v1369 = vadd.f32 %v1315, %v1353
    %v1370 = vadd.f32 %v1316, %v1354
    %v1371 = vadd.f32 %v1317, %v1355
    %v1372 = vadd.f32 %v1318, %v1356
    %v1373 = vld [vmem:[#allocation8 + $0x14] sm:$0xf]
    %v1375 = vlaneseq
    %v1376 = vshrl.u32 %v1375, 7
    %v1377 = vsub.s32 0, %v1376
    %v1378 = vrot.slane %v1373, %v1377
    %v1379 = vlaneseq
    %v1380 = vshrl.u32 %v1379, 7
    %v1381 = vsub.s32 1, %v1380
    %v1382 = vrot.slane %v1373, %v1381
    %v1383 = vlaneseq
    %v1384 = vshrl.u32 %v1383, 7
    %v1385 = vsub.s32 2, %v1384
    %v1386 = vrot.slane %v1373, %v1385
    %v1387 = vlaneseq
    %v1388 = vshrl.u32 %v1387, 7
    %v1389 = vsub.s32 3, %v1388
    %v1390 = vrot.slane %v1373, %v1389
    %v1395 = vmul.f32 %v1095, %v1378
    %v1396 = vmul.f32 %v1096, %v1382
    %v1397 = vmul.f32 %v1097, %v1386
    %v1398 = vmul.f32 %v1098, %v1390
    %v1399 = vmul.f32 %v1107, %v1378
    %v1400 = vmul.f32 %v1108, %v1382
    %v1401 = vmul.f32 %v1109, %v1386
    %v1402 = vmul.f32 %v1110, %v1390
    %v1403 = vmul.f32 %v1119, %v1378
    %v1404 = vmul.f32 %v1120, %v1382
    %v1405 = vmul.f32 %v1121, %v1386
    %v1406 = vmul.f32 %v1122, %v1390
    %v1407 = vmul.f32 %v1131, %v1378
    %v1408 = vmul.f32 %v1132, %v1382
    %v1409 = vmul.f32 %v1133, %v1386
    %v1410 = vmul.f32 %v1134, %v1390
    %v1411 = vadd.f32 %v1357, %v1395
    %v1412 = vadd.f32 %v1358, %v1396
    %v1413 = vadd.f32 %v1359, %v1397
    %v1414 = vadd.f32 %v1360, %v1398
    %v1415 = vadd.f32 %v1361, %v1399
    %v1416 = vadd.f32 %v1362, %v1400
    %v1417 = vadd.f32 %v1363, %v1401
    %v1418 = vadd.f32 %v1364, %v1402
    %v1419 = vadd.f32 %v1365, %v1403
    %v1420 = vadd.f32 %v1366, %v1404
    %v1421 = vadd.f32 %v1367, %v1405
    %v1422 = vadd.f32 %v1368, %v1406
    %v1423 = vadd.f32 %v1369, %v1407
    %v1424 = vadd.f32 %v1370, %v1408
    %v1425 = vadd.f32 %v1371, %v1409
    %v1426 = vadd.f32 %v1372, %v1410
    %v1427 = vld [vmem:[#allocation8 + $0x18] sm:$0xf]
    %v1429 = vlaneseq
    %v1430 = vshrl.u32 %v1429, 7
    %v1431 = vsub.s32 0, %v1430
    %v1432 = vrot.slane %v1427, %v1431
    %v1433 = vlaneseq
    %v1434 = vshrl.u32 %v1433, 7
    %v1435 = vsub.s32 1, %v1434
    %v1436 = vrot.slane %v1427, %v1435
    %v1437 = vlaneseq
    %v1438 = vshrl.u32 %v1437, 7
    %v1439 = vsub.s32 2, %v1438
    %v1440 = vrot.slane %v1427, %v1439
    %v1441 = vlaneseq
    %v1442 = vshrl.u32 %v1441, 7
    %v1443 = vsub.s32 3, %v1442
    %v1444 = vrot.slane %v1427, %v1443
    %v1449 = vmul.f32 %v1091, %v1432
    %v1450 = vmul.f32 %v1092, %v1436
    %v1451 = vmul.f32 %v1093, %v1440
    %v1452 = vmul.f32 %v1094, %v1444
    %v1453 = vmul.f32 %v1103, %v1432
    %v1454 = vmul.f32 %v1104, %v1436
    %v1455 = vmul.f32 %v1105, %v1440
    %v1456 = vmul.f32 %v1106, %v1444
    %v1457 = vmul.f32 %v1115, %v1432
    %v1458 = vmul.f32 %v1116, %v1436
    %v1459 = vmul.f32 %v1117, %v1440
    %v1460 = vmul.f32 %v1118, %v1444
    %v1461 = vmul.f32 %v1127, %v1432
    %v1462 = vmul.f32 %v1128, %v1436
    %v1463 = vmul.f32 %v1129, %v1440
    %v1464 = vmul.f32 %v1130, %v1444
    %v1465 = vld [vmem:[#allocation8 + $0x1c] sm:$0xf]
    %v1467 = vlaneseq
    %v1468 = vshrl.u32 %v1467, 7
    %v1469 = vsub.s32 0, %v1468
    %v1470 = vrot.slane %v1465, %v1469
    %v1471 = vlaneseq
    %v1472 = vshrl.u32 %v1471, 7
    %v1473 = vsub.s32 1, %v1472
    %v1474 = vrot.slane %v1465, %v1473
    %v1475 = vlaneseq
    %v1476 = vshrl.u32 %v1475, 7
    %v1477 = vsub.s32 2, %v1476
    %v1478 = vrot.slane %v1465, %v1477
    %v1479 = vlaneseq
    %v1480 = vshrl.u32 %v1479, 7
    %v1481 = vsub.s32 3, %v1480
    %v1482 = vrot.slane %v1465, %v1481
    %v1487 = vmul.f32 %v1087, %v1470
    %v1488 = vmul.f32 %v1088, %v1474
    %v1489 = vmul.f32 %v1089, %v1478
    %v1490 = vmul.f32 %v1090, %v1482
    %v1491 = vmul.f32 %v1099, %v1470
    %v1492 = vmul.f32 %v1100, %v1474
    %v1493 = vmul.f32 %v1101, %v1478
    %v1494 = vmul.f32 %v1102, %v1482
    %v1495 = vmul.f32 %v1111, %v1470
    %v1496 = vmul.f32 %v1112, %v1474
    %v1497 = vmul.f32 %v1113, %v1478
    %v1498 = vmul.f32 %v1114, %v1482
    %v1499 = vmul.f32 %v1123, %v1470
    %v1500 = vmul.f32 %v1124, %v1474
    %v1501 = vmul.f32 %v1125, %v1478
    %v1502 = vmul.f32 %v1126, %v1482
    %v1503 = vadd.f32 %v1449, %v1487
    %v1504 = vadd.f32 %v1450, %v1488
    %v1505 = vadd.f32 %v1451, %v1489
    %v1506 = vadd.f32 %v1452, %v1490
    %v1507 = vadd.f32 %v1453, %v1491
    %v1508 = vadd.f32 %v1454, %v1492
    %v1509 = vadd.f32 %v1455, %v1493
    %v1510 = vadd.f32 %v1456, %v1494
    %v1511 = vadd.f32 %v1457, %v1495
    %v1512 = vadd.f32 %v1458, %v1496
    %v1513 = vadd.f32 %v1459, %v1497
    %v1514 = vadd.f32 %v1460, %v1498
    %v1515 = vadd.f32 %v1461, %v1499
    %v1516 = vadd.f32 %v1462, %v1500
    %v1517 = vadd.f32 %v1463, %v1501
    %v1518 = vadd.f32 %v1464, %v1502
    %v1519 = vld [vmem:[#allocation8 + $0x20] sm:$0xf]
    %v1521 = vlaneseq
    %v1522 = vshrl.u32 %v1521, 7
    %v1523 = vsub.s32 0, %v1522
    %v1524 = vrot.slane %v1519, %v1523
    %v1525 = vlaneseq
    %v1526 = vshrl.u32 %v1525, 7
    %v1527 = vsub.s32 1, %v1526
    %v1528 = vrot.slane %v1519, %v1527
    %v1529 = vlaneseq
    %v1530 = vshrl.u32 %v1529, 7
    %v1531 = vsub.s32 2, %v1530
    %v1532 = vrot.slane %v1519, %v1531
    %v1533 = vlaneseq
    %v1534 = vshrl.u32 %v1533, 7
    %v1535 = vsub.s32 3, %v1534
    %v1536 = vrot.slane %v1519, %v1535
    %v1541 = vmul.f32 %v1095, %v1524
    %v1542 = vmul.f32 %v1096, %v1528
    %v1543 = vmul.f32 %v1097, %v1532
    %v1544 = vmul.f32 %v1098, %v1536
    %v1545 = vmul.f32 %v1107, %v1524
    %v1546 = vmul.f32 %v1108, %v1528
    %v1547 = vmul.f32 %v1109, %v1532
    %v1548 = vmul.f32 %v1110, %v1536
    %v1549 = vmul.f32 %v1119, %v1524
    %v1550 = vmul.f32 %v1120, %v1528
    %v1551 = vmul.f32 %v1121, %v1532
    %v1552 = vmul.f32 %v1122, %v1536
    %v1553 = vmul.f32 %v1131, %v1524
    %v1554 = vmul.f32 %v1132, %v1528
    %v1555 = vmul.f32 %v1133, %v1532
    %v1556 = vmul.f32 %v1134, %v1536
    %v1557 = vadd.f32 %v1503, %v1541
    %v1558 = vadd.f32 %v1504, %v1542
    %v1559 = vadd.f32 %v1505, %v1543
    %v1560 = vadd.f32 %v1506, %v1544
    %v1561 = vadd.f32 %v1507, %v1545
    %v1562 = vadd.f32 %v1508, %v1546
    %v1563 = vadd.f32 %v1509, %v1547
    %v1564 = vadd.f32 %v1510, %v1548
    %v1565 = vadd.f32 %v1511, %v1549
    %v1566 = vadd.f32 %v1512, %v1550
    %v1567 = vadd.f32 %v1513, %v1551
    %v1568 = vadd.f32 %v1514, %v1552
    %v1569 = vadd.f32 %v1515, %v1553
    %v1570 = vadd.f32 %v1516, %v1554
    %v1571 = vadd.f32 %v1517, %v1555
    %v1572 = vadd.f32 %v1518, %v1556
    %v1573 = vld [vmem:[%s5] sm:$0xf]
    %v1574 = vld [vmem:[%s5 + $0x4] sm:$0xf]
    %v1575 = vld [vmem:[%s5 + $0x8] sm:$0xf]
    %v1576 = vld [vmem:[%s5 + $0xc] sm:$0xf]
    %v1577 = vpack.c.bf16 %v1269, %v1265
    %v1578 = vpack.c.bf16 %v1270, %v1266
    %v1579 = vpack.c.bf16 %v1271, %v1267
    %v1580 = vpack.c.bf16 %v1272, %v1268
    %v1581 = vpack.c.bf16 %v1277, %v1273
    %v1582 = vpack.c.bf16 %v1278, %v1274
    %v1583 = vpack.c.bf16 %v1279, %v1275
    %v1584 = vpack.c.bf16 %v1280, %v1276
    %v1589 = vunpack.c.l.b16 %v1573
    %v1590 = vunpack.c.l.b16 %v1574
    %v1591 = vunpack.c.l.b16 %v1575
    %v1592 = vunpack.c.l.b16 %v1576
    %v1593 = vpack.c.b16 %v1590, %v1589
    %v1594 = vpack.c.b16 %v1592, %v1591
    %vm1595 = vcmask 261120
    %v1597 = vsel %vm1595, %v1593, 0
    %v1600 = vsel %vm1595, %v1594, 0
    %1602 = vmatprep.subr.bf16.mxu0 %v1578
    %1603 = vmatpush1.bf16.msra.mxu0 %v1577
    %1604 = vmatprep.subr.bf16.mxu0 %v1582
    %1605 = vmatpush1.bf16.msra.mxu0 %v1581
    %1606 = vmatprep.subr.bf16.mxu0 0
    %1607 = vmatpush1.bf16.msra.mxu0 0
    %1608 = vmatprep.subr.bf16.mxu0 0
    %1609 = vmatpush1.bf16.msra.mxu0 0
    %1610 = vmatprep.subr.bf16.mxu0 0
    %1611 = vmatpush1.bf16.msra.mxu0 0
    %1612 = vmatprep.subr.bf16.mxu0 0
    %1613 = vmatpush1.bf16.msra.mxu0 0
    %1614 = vmatprep.subr.bf16.mxu0 0
    %1615 = vmatpush1.bf16.msra.mxu0 0
    %1616 = vmatprep.subr.bf16.mxu0 0
    %1617 = vmatpush1.bf16.msra.mxu0 0
    %1618 = vmatprep.subr.bf16.mxu0 0
    %1619 = vmatpush1.bf16.msra.mxu0 0
    %1620 = vmatprep.subr.bf16.mxu0 0
    %1621 = vmatpush1.bf16.msra.mxu0 0
    %1622 = vmatprep.subr.bf16.mxu0 0
    %1623 = vmatpush1.bf16.msra.mxu0 0
    %1624 = vmatprep.subr.bf16.mxu0 0
    %1625 = vmatpush1.bf16.msra.mxu0 0
    %1626 = vmatprep.subr.bf16.mxu0 0
    %1627 = vmatpush1.bf16.msra.mxu0 0
    %1628 = vmatprep.subr.bf16.mxu0 0
    %1629 = vmatpush1.bf16.msra.mxu0 0
    %1630 = vmatprep.subr.bf16.mxu0 0
    %1631 = vmatpush1.bf16.msra.mxu0 0
    %1632 = vmatprep.subr.bf16.mxu0 0
    %1633 = vmatpush1.bf16.msra.mxu0 0
    %1634 = vmatprep.mubr.bf16.mxu0 0
    %1635 = vmatmul.mubr.bf16.gmra.mrb[0].mxu0 %v1597
    %v1636 = vpop.f32.mrb[0].mxu0
    %v1637 = vadd.f32 0.0, %v1636
    %v1638 = vpop.f32.mrb[0].mxu0
    %v1639 = vadd.f32 0.0, %v1638
    %v1640 = vpop.f32.mrb[0].mxu0
    %v1641 = vadd.f32 0.0, %v1640
    %v1642 = vpop.f32.mrb[0].mxu0
    %v1643 = vadd.f32 0.0, %v1642
    %1644 = vmatprep.mubr.bf16.mxu0 0
    %1645 = vmatmul.mubr.bf16.gmra.mrb[0].mxu0 %v1600
    %v1646 = vpop.f32.mrb[0].mxu0
    %v1647 = vadd.f32 0.0, %v1646
    %v1648 = vpop.f32.mrb[0].mxu0
    %v1649 = vadd.f32 0.0, %v1648
    %v1650 = vpop.f32.mrb[0].mxu0
    %v1651 = vadd.f32 0.0, %v1650
    %v1652 = vpop.f32.mrb[0].mxu0
    %v1653 = vadd.f32 0.0, %v1652
    %1654 = vdwg.mxu0
    %1655 = vmatprep.subr.bf16.mxu0 %v1580
    %1656 = vmatpush1.bf16.msra.mxu0 %v1579
    %1657 = vmatprep.subr.bf16.mxu0 %v1584
    %1658 = vmatpush1.bf16.msra.mxu0 %v1583
    %1659 = vmatprep.subr.bf16.mxu0 0
    %1660 = vmatpush1.bf16.msra.mxu0 0
    %1661 = vmatprep.subr.bf16.mxu0 0
    %1662 = vmatpush1.bf16.msra.mxu0 0
    %1663 = vmatprep.subr.bf16.mxu0 0
    %1664 = vmatpush1.bf16.msra.mxu0 0
    %1665 = vmatprep.subr.bf16.mxu0 0
    %1666 = vmatpush1.bf16.msra.mxu0 0
    %1667 = vmatprep.subr.bf16.mxu0 0
    %1668 = vmatpush1.bf16.msra.mxu0 0
    %1669 = vmatprep.subr.bf16.mxu0 0
    %1670 = vmatpush1.bf16.msra.mxu0 0
    %1671 = vmatprep.subr.bf16.mxu0 0
    %1672 = vmatpush1.bf16.msra.mxu0 0
    %1673 = vmatprep.subr.bf16.mxu0 0
    %1674 = vmatpush1.bf16.msra.mxu0 0
    %1675 = vmatprep.subr.bf16.mxu0 0
    %1676 = vmatpush1.bf16.msra.mxu0 0
    %1677 = vmatprep.subr.bf16.mxu0 0
    %1678 = vmatpush1.bf16.msra.mxu0 0
    %1679 = vmatprep.subr.bf16.mxu0 0
    %1680 = vmatpush1.bf16.msra.mxu0 0
    %1681 = vmatprep.subr.bf16.mxu0 0
    %1682 = vmatpush1.bf16.msra.mxu0 0
    %1683 = vmatprep.subr.bf16.mxu0 0
    %1684 = vmatpush1.bf16.msra.mxu0 0
    %1685 = vmatprep.subr.bf16.mxu0 0
    %1686 = vmatpush1.bf16.msra.mxu0 0
    %1687 = vmatprep.mubr.bf16.mxu0 0
    %1688 = vmatmul.mubr.bf16.gmra.mrb[0].mxu0 %v1597
    %v1689 = vpop.f32.mrb[0].mxu0
    %v1690 = vadd.f32 0.0, %v1689
    %v1691 = vpop.f32.mrb[0].mxu0
    %v1692 = vadd.f32 0.0, %v1691
    %v1693 = vpop.f32.mrb[0].mxu0
    %v1694 = vadd.f32 0.0, %v1693
    %v1695 = vpop.f32.mrb[0].mxu0
    %v1696 = vadd.f32 0.0, %v1695
    %1697 = vmatprep.mubr.bf16.mxu0 0
    %1698 = vmatmul.mubr.bf16.gmra.mrb[0].mxu0 %v1600
    %v1699 = vpop.f32.mrb[0].mxu0
    %v1700 = vadd.f32 0.0, %v1699
    %v1701 = vpop.f32.mrb[0].mxu0
    %v1702 = vadd.f32 0.0, %v1701
    %v1703 = vpop.f32.mrb[0].mxu0
    %v1704 = vadd.f32 0.0, %v1703
    %v1705 = vpop.f32.mrb[0].mxu0
    %v1706 = vadd.f32 0.0, %v1705
    %1707 = vdwg.mxu0
    %v1708 = vadd.f32 %v1411, %v1637
    %v1709 = vadd.f32 %v1412, %v1639
    %v1710 = vadd.f32 %v1413, %v1690
    %v1711 = vadd.f32 %v1414, %v1692
    %v1712 = vadd.f32 %v1415, %v1641
    %v1713 = vadd.f32 %v1416, %v1643
    %v1714 = vadd.f32 %v1417, %v1694
    %v1715 = vadd.f32 %v1418, %v1696
    %v1716 = vadd.f32 %v1419, %v1647
    %v1717 = vadd.f32 %v1420, %v1649
    %v1718 = vadd.f32 %v1421, %v1700
    %v1719 = vadd.f32 %v1422, %v1702
    %v1720 = vadd.f32 %v1423, %v1651
    %v1721 = vadd.f32 %v1424, %v1653
    %v1722 = vadd.f32 %v1425, %v1704
    %v1723 = vadd.f32 %v1426, %v1706
    %v1724 = vld [vmem:[#allocation11] sm:$0xf]
    %v1725 = vld [vmem:[#allocation11 + $0x4] sm:$0xf]
    %v1726 = vld [vmem:[#allocation11 + $0x8] sm:$0xf]
    %v1727 = vld [vmem:[#allocation11 + $0xc] sm:$0xf]
    %v1728 = vpack.c.bf16 %v1561, %v1557
    %v1729 = vpack.c.bf16 %v1562, %v1558
    %v1730 = vpack.c.bf16 %v1563, %v1559
    %v1731 = vpack.c.bf16 %v1564, %v1560
    %v1732 = vpack.c.bf16 %v1569, %v1565
    %v1733 = vpack.c.bf16 %v1570, %v1566
    %v1734 = vpack.c.bf16 %v1571, %v1567
    %v1735 = vpack.c.bf16 %v1572, %v1568
    %v1740 = vunpack.c.l.b16 %v1724
    %v1741 = vunpack.c.l.b16 %v1725
    %v1742 = vunpack.c.l.b16 %v1726
    %v1743 = vunpack.c.l.b16 %v1727
    %v1744 = vpack.c.b16 %v1741, %v1740
    %v1745 = vpack.c.b16 %v1743, %v1742
    %v1747 = vsel %vm1595, %v1744, 0
    %v1750 = vsel %vm1595, %v1745, 0
    %1752 = vmatprep.subr.bf16.mxu0 %v1729
    %1753 = vmatpush1.bf16.msra.mxu0 %v1728
    %1754 = vmatprep.subr.bf16.mxu0 %v1733
    %1755 = vmatpush1.bf16.msra.mxu0 %v1732
    %1756 = vmatprep.subr.bf16.mxu0 0
    %1757 = vmatpush1.bf16.msra.mxu0 0
    %1758 = vmatprep.subr.bf16.mxu0 0
    %1759 = vmatpush1.bf16.msra.mxu0 0
    %1760 = vmatprep.subr.bf16.mxu0 0
    %1761 = vmatpush1.bf16.msra.mxu0 0
    %1762 = vmatprep.subr.bf16.mxu0 0
    %1763 = vmatpush1.bf16.msra.mxu0 0
    %1764 = vmatprep.subr.bf16.mxu0 0
    %1765 = vmatpush1.bf16.msra.mxu0 0
    %1766 = vmatprep.subr.bf16.mxu0 0
    %1767 = vmatpush1.bf16.msra.mxu0 0
    %1768 = vmatprep.subr.bf16.mxu0 0
    %1769 = vmatpush1.bf16.msra.mxu0 0
    %1770 = vmatprep.subr.bf16.mxu0 0
    %1771 = vmatpush1.bf16.msra.mxu0 0
    %1772 = vmatprep.subr.bf16.mxu0 0
    %1773 = vmatpush1.bf16.msra.mxu0 0
    %1774 = vmatprep.subr.bf16.mxu0 0
    %1775 = vmatpush1.bf16.msra.mxu0 0
    %1776 = vmatprep.subr.bf16.mxu0 0
    %1777 = vmatpush1.bf16.msra.mxu0 0
    %1778 = vmatprep.subr.bf16.mxu0 0
    %1779 = vmatpush1.bf16.msra.mxu0 0
    %1780 = vmatprep.subr.bf16.mxu0 0
    %1781 = vmatpush1.bf16.msra.mxu0 0
    %1782 = vmatprep.subr.bf16.mxu0 0
    %1783 = vmatpush1.bf16.msra.mxu0 0
    %1784 = vmatprep.mubr.bf16.mxu0 0
    %1785 = vmatmul.mubr.bf16.gmra.mrb[0].mxu0 %v1747
    %v1786 = vpop.f32.mrb[0].mxu0
    %v1787 = vadd.f32 0.0, %v1786
    %v1788 = vpop.f32.mrb[0].mxu0
    %v1789 = vadd.f32 0.0, %v1788
    %v1790 = vpop.f32.mrb[0].mxu0
    %v1791 = vadd.f32 0.0, %v1790
    %v1792 = vpop.f32.mrb[0].mxu0
    %v1793 = vadd.f32 0.0, %v1792
    %1794 = vmatprep.mubr.bf16.mxu0 0
    %1795 = vmatmul.mubr.bf16.gmra.mrb[0].mxu0 %v1750
    %v1796 = vpop.f32.mrb[0].mxu0
    %v1797 = vadd.f32 0.0, %v1796
    %v1798 = vpop.f32.mrb[0].mxu0
    %v1799 = vadd.f32 0.0, %v1798
    %v1800 = vpop.f32.mrb[0].mxu0
    %v1801 = vadd.f32 0.0, %v1800
    %v1802 = vpop.f32.mrb[0].mxu0
    %v1803 = vadd.f32 0.0, %v1802
    %1804 = vdwg.mxu0
    %1805 = vmatprep.subr.bf16.mxu0 %v1731
    %1806 = vmatpush1.bf16.msra.mxu0 %v1730
    %1807 = vmatprep.subr.bf16.mxu0 %v1735
    %1808 = vmatpush1.bf16.msra.mxu0 %v1734
    %1809 = vmatprep.subr.bf16.mxu0 0
    %1810 = vmatpush1.bf16.msra.mxu0 0
    %1811 = vmatprep.subr.bf16.mxu0 0
    %1812 = vmatpush1.bf16.msra.mxu0 0
    %1813 = vmatprep.subr.bf16.mxu0 0
    %1814 = vmatpush1.bf16.msra.mxu0 0
    %1815 = vmatprep.subr.bf16.mxu0 0
    %1816 = vmatpush1.bf16.msra.mxu0 0
    %1817 = vmatprep.subr.bf16.mxu0 0
    %1818 = vmatpush1.bf16.msra.mxu0 0
    %1819 = vmatprep.subr.bf16.mxu0 0
    %1820 = vmatpush1.bf16.msra.mxu0 0
    %1821 = vmatprep.subr.bf16.mxu0 0
    %1822 = vmatpush1.bf16.msra.mxu0 0
    %1823 = vmatprep.subr.bf16.mxu0 0
    %1824 = vmatpush1.bf16.msra.mxu0 0
    %1825 = vmatprep.subr.bf16.mxu0 0
    %1826 = vmatpush1.bf16.msra.mxu0 0
    %1827 = vmatprep.subr.bf16.mxu0 0
    %1828 = vmatpush1.bf16.msra.mxu0 0
    %1829 = vmatprep.subr.bf16.mxu0 0
    %1830 = vmatpush1.bf16.msra.mxu0 0
    %1831 = vmatprep.subr.bf16.mxu0 0
    %1832 = vmatpush1.bf16.msra.mxu0 0
    %1833 = vmatprep.subr.bf16.mxu0 0
    %1834 = vmatpush1.bf16.msra.mxu0 0
    %1835 = vmatprep.subr.bf16.mxu0 0
    %1836 = vmatpush1.bf16.msra.mxu0 0
    %1837 = vmatprep.mubr.bf16.mxu0 0
    %1838 = vmatmul.mubr.bf16.gmra.mrb[0].mxu0 %v1747
    %v1839 = vpop.f32.mrb[0].mxu0
    %v1840 = vadd.f32 0.0, %v1839
    %v1841 = vpop.f32.mrb[0].mxu0
    %v1842 = vadd.f32 0.0, %v1841
    %v1843 = vpop.f32.mrb[0].mxu0
    %v1844 = vadd.f32 0.0, %v1843
    %v1845 = vpop.f32.mrb[0].mxu0
    %v1846 = vadd.f32 0.0, %v1845
    %1847 = vmatprep.mubr.bf16.mxu0 0
    %1848 = vmatmul.mubr.bf16.gmra.mrb[0].mxu0 %v1750
    %v1849 = vpop.f32.mrb[0].mxu0
    %v1850 = vadd.f32 0.0, %v1849
    %v1851 = vpop.f32.mrb[0].mxu0
    %v1852 = vadd.f32 0.0, %v1851
    %v1853 = vpop.f32.mrb[0].mxu0
    %v1854 = vadd.f32 0.0, %v1853
    %v1855 = vpop.f32.mrb[0].mxu0
    %v1856 = vadd.f32 0.0, %v1855
    %1857 = vdwg.mxu0
    %v1858 = vadd.f32 %v1708, %v1787
    %v1859 = vadd.f32 %v1709, %v1789
    %v1860 = vadd.f32 %v1710, %v1840
    %v1861 = vadd.f32 %v1711, %v1842
    %v1862 = vadd.f32 %v1712, %v1791
    %v1863 = vadd.f32 %v1713, %v1793
    %v1864 = vadd.f32 %v1714, %v1844
    %v1865 = vadd.f32 %v1715, %v1846
    %v1866 = vadd.f32 %v1716, %v1797
    %v1867 = vadd.f32 %v1717, %v1799
    %v1868 = vadd.f32 %v1718, %v1850
    %v1869 = vadd.f32 %v1719, %v1852
    %v1870 = vadd.f32 %v1720, %v1801
    %v1871 = vadd.f32 %v1721, %v1803
    %v1872 = vadd.f32 %v1722, %v1854
    %v1873 = vadd.f32 %v1723, %v1856
    %v1874 = vld [vmem:[#allocation10] sm:$0xf]
    %v1876 = vlaneseq
    %v1877 = vshrl.u32 %v1876, 7
    %v1878 = vsub.s32 0, %v1877
    %v1879 = vrot.slane %v1874, %v1878
    %v1880 = vlaneseq
    %v1881 = vshrl.u32 %v1880, 7
    %v1882 = vsub.s32 1, %v1881
    %v1883 = vrot.slane %v1874, %v1882
    %v1884 = vlaneseq
    %v1885 = vshrl.u32 %v1884, 7
    %v1886 = vsub.s32 2, %v1885
    %v1887 = vrot.slane %v1874, %v1886
    %v1888 = vlaneseq
    %v1889 = vshrl.u32 %v1888, 7
    %v1890 = vsub.s32 3, %v1889
    %v1891 = vrot.slane %v1874, %v1890
    %v1896 = vadd.f32 %v1858, %v1879
    %v1897 = vadd.f32 %v1859, %v1883
    %v1898 = vadd.f32 %v1860, %v1887
    %v1899 = vadd.f32 %v1861, %v1891
    %v1900 = vadd.f32 %v1862, %v1879
    %v1901 = vadd.f32 %v1863, %v1883
    %v1902 = vadd.f32 %v1864, %v1887
    %v1903 = vadd.f32 %v1865, %v1891
    %v1904 = vadd.f32 %v1866, %v1879
    %v1905 = vadd.f32 %v1867, %v1883
    %v1906 = vadd.f32 %v1868, %v1887
    %v1907 = vadd.f32 %v1869, %v1891
    %v1908 = vadd.f32 %v1870, %v1879
    %v1909 = vadd.f32 %v1871, %v1883
    %v1910 = vadd.f32 %v1872, %v1887
    %v1911 = vadd.f32 %v1873, %v1891
    %v1912 = vmax.f32 %v1896, 0.0
    %v1913 = vmax.f32 %v1897, 0.0
    %v1914 = vmax.f32 %v1898, 0.0
    %v1915 = vmax.f32 %v1899, 0.0
    %v1916 = vmax.f32 %v1900, 0.0
    %v1917 = vmax.f32 %v1901, 0.0
    %v1918 = vmax.f32 %v1902, 0.0
    %v1919 = vmax.f32 %v1903, 0.0
    %v1920 = vmax.f32 %v1904, 0.0
    %v1921 = vmax.f32 %v1905, 0.0
    %v1922 = vmax.f32 %v1906, 0.0
    %v1923 = vmax.f32 %v1907, 0.0
    %v1924 = vmax.f32 %v1908, 0.0
    %v1925 = vmax.f32 %v1909, 0.0
    %v1926 = vmax.f32 %v1910, 0.0
    %v1927 = vmax.f32 %v1911, 0.0
    %v1928 = vpack.c.bf16 %v1916, %v1912
    %v1929 = vpack.c.bf16 %v1917, %v1913
    %v1930 = vpack.c.bf16 %v1918, %v1914
    %v1931 = vpack.c.bf16 %v1919, %v1915
    %v1932 = vpack.c.bf16 %v1924, %v1920
    %v1933 = vpack.c.bf16 %v1925, %v1921
    %v1934 = vpack.c.bf16 %v1926, %v1922
    %v1935 = vpack.c.bf16 %v1927, %v1923
    %v1936 = vld [vmem:[#allocation13] sm:$0xff]
    %v1937 = vld [vmem:[#allocation13 + $0x8] sm:$0xff]
    %v1938 = vld [vmem:[#allocation13 + $0x10] sm:$0xff]
    %v1939 = vld [vmem:[#allocation13 + $0x18] sm:$0xff]
    %v1940 = vld [vmem:[#allocation13 + $0x20] sm:$0xff]
    %v1941 = vld [vmem:[#allocation13 + $0x28] sm:$0xff]
    %v1942 = vld [vmem:[#allocation13 + $0x30] sm:$0xff]
    %v1943 = vld [vmem:[#allocation13 + $0x38] sm:$0xff]
    %v1944 = vld [vmem:[#allocation13 + $0x40] sm:$0xff]
    %v1945 = vld [vmem:[#allocation13 + $0x48] sm:$0xff]
    %v1946 = vld [vmem:[#allocation13 + $0x50] sm:$0xff]
    %v1947 = vld [vmem:[#allocation13 + $0x58] sm:$0xff]
    %v1948 = vld [vmem:[#allocation13 + $0x60] sm:$0xff]
    %v1949 = vld [vmem:[#allocation13 + $0x68] sm:$0xff]
    %v1950 = vld [vmem:[#allocation13 + $0x70] sm:$0xff]
    %v1951 = vld [vmem:[#allocation13 + $0x78] sm:$0xff]
    %v1952 = vld [vmem:[#allocation13 + $0x80] sm:$0xff]
    %v1953 = vld [vmem:[#allocation13 + $0x88] sm:$0xff]
    %v1954 = vld [vmem:[#allocation13 + $0x90] sm:$0xff]
    %v1955 = vld [vmem:[#allocation13 + $0x98] sm:$0xff]
    %v1956 = vld [vmem:[#allocation13 + $0xa0] sm:$0xff]
    %v1957 = vld [vmem:[#allocation13 + $0xa8] sm:$0xff]
    %v1958 = vld [vmem:[#allocation13 + $0xb0] sm:$0xff]
    %v1959 = vld [vmem:[#allocation13 + $0xb8] sm:$0xff]
    %v1960 = vld [vmem:[#allocation13 + $0xc0] sm:$0xff]
    %v1961 = vld [vmem:[#allocation13 + $0xc8] sm:$0xff]
    %v1962 = vld [vmem:[#allocation13 + $0xd0] sm:$0xff]
    %v1963 = vld [vmem:[#allocation13 + $0xd8] sm:$0xff]
    %v1964 = vld [vmem:[#allocation13 + $0xe0] sm:$0xff]
    %v1965 = vld [vmem:[#allocation13 + $0xe8] sm:$0xff]
    %v1966 = vld [vmem:[#allocation13 + $0xf0] sm:$0xff]
    %v1967 = vld [vmem:[#allocation13 + $0xf8] sm:$0xff]
    %v1968 = vld [vmem:[#allocation13 + $0x100] sm:$0xff]
    %v1969 = vld [vmem:[#allocation13 + $0x108] sm:$0xff]
    %v1970 = vld [vmem:[#allocation13 + $0x110] sm:$0xff]
    %v1971 = vld [vmem:[#allocation13 + $0x118] sm:$0xff]
    %v1972 = vld [vmem:[#allocation13 + $0x120] sm:$0xff]
    %v1973 = vld [vmem:[#allocation13 + $0x128] sm:$0xff]
    %v1974 = vld [vmem:[#allocation13 + $0x130] sm:$0xff]
    %v1975 = vld [vmem:[#allocation13 + $0x138] sm:$0xff]
    %v1976 = vld [vmem:[#allocation13 + $0x140] sm:$0xff]
    %v1977 = vld [vmem:[#allocation13 + $0x148] sm:$0xff]
    %v1978 = vld [vmem:[#allocation13 + $0x150] sm:$0xff]
    %v1979 = vld [vmem:[#allocation13 + $0x158] sm:$0xff]
    %v1980 = vld [vmem:[#allocation13 + $0x160] sm:$0xff]
    %v1981 = vld [vmem:[#allocation13 + $0x168] sm:$0xff]
    %v1982 = vld [vmem:[#allocation13 + $0x170] sm:$0xff]
    %v1983 = vld [vmem:[#allocation13 + $0x178] sm:$0xff]
    %v1984 = vld [vmem:[#allocation13 + $0x180] sm:$0xff]
    %v1985 = vld [vmem:[#allocation13 + $0x188] sm:$0xff]
    %v1986 = vld [vmem:[#allocation13 + $0x190] sm:$0xff]
    %v1987 = vld [vmem:[#allocation13 + $0x198] sm:$0xff]
    %v1988 = vld [vmem:[#allocation13 + $0x1a0] sm:$0xff]
    %v1989 = vld [vmem:[#allocation13 + $0x1a8] sm:$0xff]
    %v1990 = vld [vmem:[#allocation13 + $0x1b0] sm:$0xff]
    %v1991 = vld [vmem:[#allocation13 + $0x1b8] sm:$0xff]
    %v1992 = vld [vmem:[#allocation13 + $0x1c0] sm:$0xff]
    %v1993 = vld [vmem:[#allocation13 + $0x1c8] sm:$0xff]
    %v1994 = vld [vmem:[#allocation13 + $0x1d0] sm:$0xff]
    %v1995 = vld [vmem:[#allocation13 + $0x1d8] sm:$0xff]
    %v1996 = vld [vmem:[#allocation13 + $0x1e0] sm:$0xff]
    %v1997 = vld [vmem:[#allocation13 + $0x1e8] sm:$0xff]
    %v1998 = vld [vmem:[#allocation13 + $0x1f0] sm:$0xff]
    %v1999 = vld [vmem:[#allocation13 + $0x1f8] sm:$0xff]
    %v2000 = vld [vmem:[#allocation13 + $0x200] sm:$0xff]
    %v2001 = vld [vmem:[#allocation13 + $0x208] sm:$0xff]
    %v2002 = vld [vmem:[#allocation13 + $0x210] sm:$0xff]
    %v2003 = vld [vmem:[#allocation13 + $0x218] sm:$0xff]
    %v2004 = vld [vmem:[#allocation13 + $0x220] sm:$0xff]
    %v2005 = vld [vmem:[#allocation13 + $0x228] sm:$0xff]
    %v2006 = vld [vmem:[#allocation13 + $0x230] sm:$0xff]
    %v2007 = vld [vmem:[#allocation13 + $0x238] sm:$0xff]
    %v2008 = vld [vmem:[#allocation13 + $0x240] sm:$0xff]
    %v2009 = vld [vmem:[#allocation13 + $0x248] sm:$0xff]
    %v2010 = vld [vmem:[#allocation13 + $0x250] sm:$0xff]
    %v2011 = vld [vmem:[#allocation13 + $0x258] sm:$0xff]
    %v2012 = vld [vmem:[#allocation13 + $0x260] sm:$0xff]
    %v2013 = vld [vmem:[#allocation13 + $0x268] sm:$0xff]
    %v2014 = vld [vmem:[#allocation13 + $0x270] sm:$0xff]
    %v2015 = vld [vmem:[#allocation13 + $0x278] sm:$0xff]
    %v2016 = vld [vmem:[%s8] sm:$0x3]
    %v2018 = vlaneseq
    %v2019 = vshrl.u32 %v2018, 7
    %v2020 = vsub.s32 0, %v2019
    %v2021 = vrot.slane %v2016, %v2020
    %v2022 = vlaneseq
    %v2023 = vshrl.u32 %v2022, 7
    %v2024 = vsub.s32 1, %v2023
    %v2025 = vrot.slane %v2016, %v2024
    %v2108 = vunpack.c.l.b16 %v1936
    %v2109 = vunpack.c.h.b16 %v1936
    %v2110 = vunpack.c.l.b16 %v1937
    %v2111 = vunpack.c.h.b16 %v1937
    %v2112 = vunpack.c.l.b16 %v1938
    %v2113 = vunpack.c.h.b16 %v1938
    %v2114 = vunpack.c.l.b16 %v1939
    %v2115 = vunpack.c.h.b16 %v1939
    %v2116 = vunpack.c.l.b16 %v1940
    %v2117 = vunpack.c.h.b16 %v1940
    %v2118 = vunpack.c.l.b16 %v1941
    %v2119 = vunpack.c.h.b16 %v1941
    %v2120 = vunpack.c.l.b16 %v1942
    %v2121 = vunpack.c.h.b16 %v1942
    %v2122 = vunpack.c.l.b16 %v1943
    %v2123 = vunpack.c.h.b16 %v1943
    %v2124 = vunpack.c.l.b16 %v1944
    %v2125 = vunpack.c.h.b16 %v1944
    %v2126 = vunpack.c.l.b16 %v1945
    %v2127 = vunpack.c.h.b16 %v1945
    %v2128 = vunpack.c.l.b16 %v1946
    %v2129 = vunpack.c.h.b16 %v1946
    %v2130 = vunpack.c.l.b16 %v1947
    %v2131 = vunpack.c.h.b16 %v1947
    %v2132 = vunpack.c.l.b16 %v1948
    %v2133 = vunpack.c.h.b16 %v1948
    %v2134 = vunpack.c.l.b16 %v1949
    %v2135 = vunpack.c.h.b16 %v1949
    %v2136 = vunpack.c.l.b16 %v1950
    %v2137 = vunpack.c.h.b16 %v1950
    %v2138 = vunpack.c.l.b16 %v1951
    %v2139 = vunpack.c.h.b16 %v1951
    %v2140 = vunpack.c.l.b16 %v1952
    %v2141 = vunpack.c.h.b16 %v1952
    %v2142 = vunpack.c.l.b16 %v1953
    %v2143 = vunpack.c.h.b16 %v1953
    %v2144 = vunpack.c.l.b16 %v1954
    %v2145 = vunpack.c.h.b16 %v1954
    %v2146 = vunpack.c.l.b16 %v1955
    %v2147 = vunpack.c.h.b16 %v1955
    %v2148 = vunpack.c.l.b16 %v1956
    %v2149 = vunpack.c.h.b16 %v1956
    %v2150 = vunpack.c.l.b16 %v1957
    %v2151 = vunpack.c.h.b16 %v1957
    %v2152 = vunpack.c.l.b16 %v1958
    %v2153 = vunpack.c.h.b16 %v1958
    %v2154 = vunpack.c.l.b16 %v1959
    %v2155 = vunpack.c.h.b16 %v1959
    %v2156 = vunpack.c.l.b16 %v1960
    %v2157 = vunpack.c.h.b16 %v1960
    %v2158 = vunpack.c.l.b16 %v1961
    %v2159 = vunpack.c.h.b16 %v1961
    %v2160 = vunpack.c.l.b16 %v1962
    %v2161 = vunpack.c.h.b16 %v1962
    %v2162 = vunpack.c.l.b16 %v1963
    %v2163 = vunpack.c.h.b16 %v1963
    %v2164 = vunpack.c.l.b16 %v1964
    %v2165 = vunpack.c.h.b16 %v1964
    %v2166 = vunpack.c.l.b16 %v1965
    %v2167 = vunpack.c.h.b16 %v1965
    %v2168 = vunpack.c.l.b16 %v1966
    %v2169 = vunpack.c.h.b16 %v1966
    %v2170 = vunpack.c.l.b16 %v1967
    %v2171 = vunpack.c.h.b16 %v1967
    %v2172 = vunpack.c.l.b16 %v1968
    %v2173 = vunpack.c.h.b16 %v1968
    %v2174 = vunpack.c.l.b16 %v1969
    %v2175 = vunpack.c.h.b16 %v1969
    %v2176 = vunpack.c.l.b16 %v1970
    %v2177 = vunpack.c.h.b16 %v1970
    %v2178 = vunpack.c.l.b16 %v1971
    %v2179 = vunpack.c.h.b16 %v1971
    %v2180 = vunpack.c.l.b16 %v1972
    %v2181 = vunpack.c.h.b16 %v1972
    %v2182 = vunpack.c.l.b16 %v1973
    %v2183 = vunpack.c.h.b16 %v1973
    %v2184 = vunpack.c.l.b16 %v1974
    %v2185 = vunpack.c.h.b16 %v1974
    %v2186 = vunpack.c.l.b16 %v1975
    %v2187 = vunpack.c.h.b16 %v1975
    %v2188 = vunpack.c.l.b16 %v1976
    %v2189 = vunpack.c.h.b16 %v1976
    %v2190 = vunpack.c.l.b16 %v1977
    %v2191 = vunpack.c.h.b16 %v1977
    %v2192 = vunpack.c.l.b16 %v1978
    %v2193 = vunpack.c.h.b16 %v1978
    %v2194 = vunpack.c.l.b16 %v1979
    %v2195 = vunpack.c.h.b16 %v1979
    %v2196 = vunpack.c.l.b16 %v1980
    %v2197 = vunpack.c.h.b16 %v1980
    %v2198 = vunpack.c.l.b16 %v1981
    %v2199 = vunpack.c.h.b16 %v1981
    %v2200 = vunpack.c.l.b16 %v1982
    %v2201 = vunpack.c.h.b16 %v1982
    %v2202 = vunpack.c.l.b16 %v1983
    %v2203 = vunpack.c.h.b16 %v1983
    %v2204 = vunpack.c.l.b16 %v1984
    %v2205 = vunpack.c.h.b16 %v1984
    %v2206 = vunpack.c.l.b16 %v1985
    %v2207 = vunpack.c.h.b16 %v1985
    %v2208 = vunpack.c.l.b16 %v1986
    %v2209 = vunpack.c.h.b16 %v1986
    %v2210 = vunpack.c.l.b16 %v1987
    %v2211 = vunpack.c.h.b16 %v1987
    %v2212 = vunpack.c.l.b16 %v1988
    %v2213 = vunpack.c.h.b16 %v1988
    %v2214 = vunpack.c.l.b16 %v1989
    %v2215 = vunpack.c.h.b16 %v1989
    %v2216 = vunpack.c.l.b16 %v1990
    %v2217 = vunpack.c.h.b16 %v1990
    %v2218 = vunpack.c.l.b16 %v1991
    %v2219 = vunpack.c.h.b16 %v1991
    %v2220 = vunpack.c.l.b16 %v1992
    %v2221 = vunpack.c.h.b16 %v1992
    %v2222 = vunpack.c.l.b16 %v1993
    %v2223 = vunpack.c.h.b16 %v1993
    %v2224 = vunpack.c.l.b16 %v1994
    %v2225 = vunpack.c.h.b16 %v1994
    %v2226 = vunpack.c.l.b16 %v1995
    %v2227 = vunpack.c.h.b16 %v1995
    %v2228 = vunpack.c.l.b16 %v1996
    %v2229 = vunpack.c.h.b16 %v1996
    %v2230 = vunpack.c.l.b16 %v1997
    %v2231 = vunpack.c.h.b16 %v1997
    %v2232 = vunpack.c.l.b16 %v1998
    %v2233 = vunpack.c.h.b16 %v1998
    %v2234 = vunpack.c.l.b16 %v1999
    %v2235 = vunpack.c.h.b16 %v1999
    %v2236 = vunpack.c.l.b16 %v2000
    %v2237 = vunpack.c.h.b16 %v2000
    %v2238 = vunpack.c.l.b16 %v2001
    %v2239 = vunpack.c.h.b16 %v2001
    %v2240 = vunpack.c.l.b16 %v2002
    %v2241 = vunpack.c.h.b16 %v2002
    %v2242 = vunpack.c.l.b16 %v2003
    %v2243 = vunpack.c.h.b16 %v2003
    %v2244 = vunpack.c.l.b16 %v2004
    %v2245 = vunpack.c.h.b16 %v2004
    %v2246 = vunpack.c.l.b16 %v2005
    %v2247 = vunpack.c.h.b16 %v2005
    %v2248 = vunpack.c.l.b16 %v2006
    %v2249 = vunpack.c.h.b16 %v2006
    %v2250 = vunpack.c.l.b16 %v2007
    %v2251 = vunpack.c.h.b16 %v2007
    %v2252 = vunpack.c.l.b16 %v2008
    %v2253 = vunpack.c.h.b16 %v2008
    %v2254 = vunpack.c.l.b16 %v2009
    %v2255 = vunpack.c.h.b16 %v2009
    %v2256 = vunpack.c.l.b16 %v2010
    %v2257 = vunpack.c.h.b16 %v2010
    %v2258 = vunpack.c.l.b16 %v2011
    %v2259 = vunpack.c.h.b16 %v2011
    %v2260 = vunpack.c.l.b16 %v2012
    %v2261 = vunpack.c.h.b16 %v2012
    %v2262 = vunpack.c.l.b16 %v2013
    %v2263 = vunpack.c.h.b16 %v2013
    %v2264 = vunpack.c.l.b16 %v2014
    %v2265 = vunpack.c.h.b16 %v2014
    %v2266 = vunpack.c.l.b16 %v2015
    %v2267 = vunpack.c.h.b16 %v2015
    %v2268 = vpack.c.b16 %v2110, %v2108
    %v2269 = vpack.c.b16 %v2111, %v2109
    %v2270 = vpack.c.b16 %v2114, %v2112
    %v2271 = vpack.c.b16 %v2115, %v2113
    %v2272 = vpack.c.b16 %v2118, %v2116
    %v2273 = vpack.c.b16 %v2119, %v2117
    %v2274 = vpack.c.b16 %v2122, %v2120
    %v2275 = vpack.c.b16 %v2123, %v2121
    %v2276 = vpack.c.b16 %v2126, %v2124
    %v2277 = vpack.c.b16 %v2127, %v2125
    %v2278 = vpack.c.b16 %v2130, %v2128
    %v2279 = vpack.c.b16 %v2131, %v2129
    %v2280 = vpack.c.b16 %v2134, %v2132
    %v2281 = vpack.c.b16 %v2135, %v2133
    %v2282 = vpack.c.b16 %v2138, %v2136
    %v2283 = vpack.c.b16 %v2139, %v2137
    %v2284 = vpack.c.b16 %v2142, %v2140
    %v2285 = vpack.c.b16 %v2143, %v2141
    %v2286 = vpack.c.b16 %v2146, %v2144
    %v2287 = vpack.c.b16 %v2147, %v2145
    %v2288 = vpack.c.b16 %v2150, %v2148
    %v2289 = vpack.c.b16 %v2151, %v2149
    %v2290 = vpack.c.b16 %v2154, %v2152
    %v2291 = vpack.c.b16 %v2155, %v2153
    %v2292 = vpack.c.b16 %v2158, %v2156
    %v2293 = vpack.c.b16 %v2159, %v2157
    %v2294 = vpack.c.b16 %v2162, %v2160
    %v2295 = vpack.c.b16 %v2163, %v2161
    %v2296 = vpack.c.b16 %v2166, %v2164
    %v2297 = vpack.c.b16 %v2167, %v2165
    %v2298 = vpack.c.b16 %v2170, %v2168
    %v2299 = vpack.c.b16 %v2171, %v2169
    %v2300 = vpack.c.b16 %v2174, %v2172
    %v2301 = vpack.c.b16 %v2175, %v2173
    %v2302 = vpack.c.b16 %v2178, %v2176
    %v2303 = vpack.c.b16 %v2179, %v2177
    %v2304 = vpack.c.b16 %v2182, %v2180
    %v2305 = vpack.c.b16 %v2183, %v2181
    %v2306 = vpack.c.b16 %v2186, %v2184
    %v2307 = vpack.c.b16 %v2187, %v2185
    %v2308 = vpack.c.b16 %v2190, %v2188
    %v2309 = vpack.c.b16 %v2191, %v2189
    %v2310 = vpack.c.b16 %v2194, %v2192
    %v2311 = vpack.c.b16 %v2195, %v2193
    %v2312 = vpack.c.b16 %v2198, %v2196
    %v2313 = vpack.c.b16 %v2199, %v2197
    %v2314 = vpack.c.b16 %v2202, %v2200
    %v2315 = vpack.c.b16 %v2203, %v2201
    %v2316 = vpack.c.b16 %v2206, %v2204
    %v2317 = vpack.c.b16 %v2207, %v2205
    %v2318 = vpack.c.b16 %v2210, %v2208
    %v2319 = vpack.c.b16 %v2211, %v2209
    %v2320 = vpack.c.b16 %v2214, %v2212
    %v2321 = vpack.c.b16 %v2215, %v2213
    %v2322 = vpack.c.b16 %v2218, %v2216
    %v2323 = vpack.c.b16 %v2219, %v2217
    %v2324 = vpack.c.b16 %v2222, %v2220
    %v2325 = vpack.c.b16 %v2223, %v2221
    %v2326 = vpack.c.b16 %v2226, %v2224
    %v2327 = vpack.c.b16 %v2227, %v2225
    %v2328 = vpack.c.b16 %v2230, %v2228
    %v2329 = vpack.c.b16 %v2231, %v2229
    %v2330 = vpack.c.b16 %v2234, %v2232
    %v2331 = vpack.c.b16 %v2235, %v2233
    %v2332 = vpack.c.b16 %v2238, %v2236
    %v2333 = vpack.c.b16 %v2239, %v2237
    %v2334 = vpack.c.b16 %v2242, %v2240
    %v2335 = vpack.c.b16 %v2243, %v2241
    %v2336 = vpack.c.b16 %v2246, %v2244
    %v2337 = vpack.c.b16 %v2247, %v2245
    %v2338 = vpack.c.b16 %v2250, %v2248
    %v2339 = vpack.c.b16 %v2251, %v2249
    %v2340 = vpack.c.b16 %v2254, %v2252
    %v2341 = vpack.c.b16 %v2255, %v2253
    %v2342 = vpack.c.b16 %v2258, %v2256
    %v2343 = vpack.c.b16 %v2259, %v2257
    %v2344 = vpack.c.b16 %v2262, %v2260
    %v2345 = vpack.c.b16 %v2263, %v2261
    %v2346 = vpack.c.b16 %v2266, %v2264
    %v2347 = vpack.c.b16 %v2267, %v2265
    %2428 = vmatprep.subr.bf16.mxu0 %v2269
    %2429 = vmatpush1.bf16.msra.mxu0 %v2268
    %2430 = vmatprep.subr.bf16.mxu0 %v2271
    %2431 = vmatpush1.bf16.msra.mxu0 %v2270
    %2432 = vmatprep.subr.bf16.mxu0 %v2273
    %2433 = vmatpush1.bf16.msra.mxu0 %v2272
    %2434 = vmatprep.subr.bf16.mxu0 %v2275
    %2435 = vmatpush1.bf16.msra.mxu0 %v2274
    %2436 = vmatprep.subr.bf16.mxu0 %v2277
    %2437 = vmatpush1.bf16.msra.mxu0 %v2276
    %2438 = vmatprep.subr.bf16.mxu0 %v2279
    %2439 = vmatpush1.bf16.msra.mxu0 %v2278
    %2440 = vmatprep.subr.bf16.mxu0 %v2281
    %2441 = vmatpush1.bf16.msra.mxu0 %v2280
    %2442 = vmatprep.subr.bf16.mxu0 %v2283
    %2443 = vmatpush1.bf16.msra.mxu0 %v2282
    %2444 = vmatprep.subr.bf16.mxu0 %v2285
    %2445 = vmatpush1.bf16.msra.mxu0 %v2284
    %2446 = vmatprep.subr.bf16.mxu0 %v2287
    %2447 = vmatpush1.bf16.msra.mxu0 %v2286
    %2448 = vmatprep.subr.bf16.mxu0 %v2289
    %2449 = vmatpush1.bf16.msra.mxu0 %v2288
    %2450 = vmatprep.subr.bf16.mxu0 %v2291
    %2451 = vmatpush1.bf16.msra.mxu0 %v2290
    %2452 = vmatprep.subr.bf16.mxu0 %v2293
    %2453 = vmatpush1.bf16.msra.mxu0 %v2292
    %2454 = vmatprep.subr.bf16.mxu0 %v2295
    %2455 = vmatpush1.bf16.msra.mxu0 %v2294
    %2456 = vmatprep.subr.bf16.mxu0 %v2297
    %2457 = vmatpush1.bf16.msra.mxu0 %v2296
    %2458 = vmatprep.subr.bf16.mxu0 %v2299
    %2459 = vmatpush1.bf16.msra.mxu0 %v2298
    %2460 = vmatprep.mubr.bf16.mxu0 %v1929
    %2461 = vmatmul.mubr.bf16.gmra.mrb[0].mxu0 %v1928
    %v2462 = vpop.f32.mrb[0].mxu0
    %v2463 = vadd.f32 %v2021, %v2462
    %v2464 = vpop.f32.mrb[0].mxu0
    %v2465 = vadd.f32 %v2025, %v2464
    %v2466 = vpop.f32.mrb[0].mxu0
    %v2467 = vadd.f32 %v2021, %v2466
    %v2468 = vpop.f32.mrb[0].mxu0
    %v2469 = vadd.f32 %v2025, %v2468
    %2470 = vmatprep.mubr.bf16.mxu0 %v1933
    %2471 = vmatmul.mubr.bf16.gmra.mrb[0].mxu0 %v1932
    %v2472 = vpop.f32.mrb[0].mxu0
    %v2473 = vadd.f32 %v2021, %v2472
    %v2474 = vpop.f32.mrb[0].mxu0
    %v2475 = vadd.f32 %v2025, %v2474
    %v2476 = vpop.f32.mrb[0].mxu0
    %v2477 = vadd.f32 %v2021, %v2476
    %v2478 = vpop.f32.mrb[0].mxu0
    %v2479 = vadd.f32 %v2025, %v2478
    %2480 = vdwg.mxu0
    %2481 = vmatprep.subr.bf16.mxu0 %v2301
    %2482 = vmatpush1.bf16.msra.mxu0 %v2300
    %2483 = vmatprep.subr.bf16.mxu0 %v2303
    %2484 = vmatpush1.bf16.msra.mxu0 %v2302
    %2485 = vmatprep.subr.bf16.mxu0 %v2305
    %2486 = vmatpush1.bf16.msra.mxu0 %v2304
    %2487 = vmatprep.subr.bf16.mxu0 %v2307
    %2488 = vmatpush1.bf16.msra.mxu0 %v2306
    %2489 = vmatprep.subr.bf16.mxu0 %v2309
    %2490 = vmatpush1.bf16.msra.mxu0 %v2308
    %2491 = vmatprep.subr.bf16.mxu0 %v2311
    %2492 = vmatpush1.bf16.msra.mxu0 %v2310
    %2493 = vmatprep.subr.bf16.mxu0 %v2313
    %2494 = vmatpush1.bf16.msra.mxu0 %v2312
    %2495 = vmatprep.subr.bf16.mxu0 %v2315
    %2496 = vmatpush1.bf16.msra.mxu0 %v2314
    %2497 = vmatprep.subr.bf16.mxu0 %v2317
    %2498 = vmatpush1.bf16.msra.mxu0 %v2316
    %2499 = vmatprep.subr.bf16.mxu0 %v2319
    %2500 = vmatpush1.bf16.msra.mxu0 %v2318
    %2501 = vmatprep.subr.bf16.mxu0 %v2321
    %2502 = vmatpush1.bf16.msra.mxu0 %v2320
    %2503 = vmatprep.subr.bf16.mxu0 %v2323
    %2504 = vmatpush1.bf16.msra.mxu0 %v2322
    %2505 = vmatprep.subr.bf16.mxu0 %v2325
    %2506 = vmatpush1.bf16.msra.mxu0 %v2324
    %2507 = vmatprep.subr.bf16.mxu0 %v2327
    %2508 = vmatpush1.bf16.msra.mxu0 %v2326
    %2509 = vmatprep.subr.bf16.mxu0 %v2329
    %2510 = vmatpush1.bf16.msra.mxu0 %v2328
    %2511 = vmatprep.subr.bf16.mxu0 %v2331
    %2512 = vmatpush1.bf16.msra.mxu0 %v2330
    %2513 = vmatprep.mubr.bf16.mxu0 %v1931
    %2514 = vmatmul.mubr.bf16.gmra.mrb[0].mxu0 %v1930
    %v2515 = vpop.f32.mrb[0].mxu0
    %v2516 = vadd.f32 %v2463, %v2515
    %v2517 = vpop.f32.mrb[0].mxu0
    %v2518 = vadd.f32 %v2465, %v2517
    %v2519 = vpop.f32.mrb[0].mxu0
    %v2520 = vadd.f32 %v2467, %v2519
    %v2521 = vpop.f32.mrb[0].mxu0
    %v2522 = vadd.f32 %v2469, %v2521
    %2523 = vmatprep.mubr.bf16.mxu0 %v1935
    %2524 = vmatmul.mubr.bf16.gmra.mrb[0].mxu0 %v1934
    %v2525 = vpop.f32.mrb[0].mxu0
    %v2526 = vadd.f32 %v2473, %v2525
    %v2527 = vpop.f32.mrb[0].mxu0
    %v2528 = vadd.f32 %v2475, %v2527
    %v2529 = vpop.f32.mrb[0].mxu0
    %v2530 = vadd.f32 %v2477, %v2529
    %v2531 = vpop.f32.mrb[0].mxu0
    %v2532 = vadd.f32 %v2479, %v2531
    %2533 = vdwg.mxu0
    %2534 = vmatprep.subr.bf16.mxu0 %v2333
    %2535 = vmatpush1.bf16.msra.mxu0 %v2332
    %2536 = vmatprep.subr.bf16.mxu0 %v2335
    %2537 = vmatpush1.bf16.msra.mxu0 %v2334
    %2538 = vmatprep.subr.bf16.mxu0 %v2337
    %2539 = vmatpush1.bf16.msra.mxu0 %v2336
    %2540 = vmatprep.subr.bf16.mxu0 %v2339
    %2541 = vmatpush1.bf16.msra.mxu0 %v2338
    %2542 = vmatprep.subr.bf16.mxu0 %v2341
    %2543 = vmatpush1.bf16.msra.mxu0 %v2340
    %2544 = vmatprep.subr.bf16.mxu0 %v2343
    %2545 = vmatpush1.bf16.msra.mxu0 %v2342
    %2546 = vmatprep.subr.bf16.mxu0 %v2345
    %2547 = vmatpush1.bf16.msra.mxu0 %v2344
    %2548 = vmatprep.subr.bf16.mxu0 %v2347
    %2549 = vmatpush1.bf16.msra.mxu0 %v2346
    %2550 = vmatprep.subr.bf16.mxu0 0
    %2551 = vmatpush1.bf16.msra.mxu0 0
    %2552 = vmatprep.subr.bf16.mxu0 0
    %2553 = vmatpush1.bf16.msra.mxu0 0
    %2554 = vmatprep.subr.bf16.mxu0 0
    %2555 = vmatpush1.bf16.msra.mxu0 0
    %2556 = vmatprep.subr.bf16.mxu0 0
    %2557 = vmatpush1.bf16.msra.mxu0 0
    %2558 = vmatprep.subr.bf16.mxu0 0
    %2559 = vmatpush1.bf16.msra.mxu0 0
    %2560 = vmatprep.subr.bf16.mxu0 0
    %2561 = vmatpush1.bf16.msra.mxu0 0
    %2562 = vmatprep.subr.bf16.mxu0 0
    %2563 = vmatpush1.bf16.msra.mxu0 0
    %2564 = vmatprep.subr.bf16.mxu0 0
    %2565 = vmatpush1.bf16.msra.mxu0 0
    %2566 = vmatprep.mubr.bf16.mxu0 0
    %2567 = vmatmul.mubr.bf16.gmra.mrb[0].mxu0 %v127
    %v2568 = vpop.f32.mrb[0].mxu0
    %v2569 = vadd.f32 %v2516, %v2568
    %v2570 = vpop.f32.mrb[0].mxu0
    %v2571 = vadd.f32 %v2518, %v2570
    %v2572 = vpop.f32.mrb[0].mxu0
    %v2573 = vadd.f32 %v2520, %v2572
    %v2574 = vpop.f32.mrb[0].mxu0
    %v2575 = vadd.f32 %v2522, %v2574
    %2576 = vmatprep.mubr.bf16.mxu0 0
    %2577 = vmatmul.mubr.bf16.gmra.mrb[0].mxu0 %v128
    %v2578 = vpop.f32.mrb[0].mxu0
    %v2579 = vadd.f32 %v2526, %v2578
    %v2580 = vpop.f32.mrb[0].mxu0
    %v2581 = vadd.f32 %v2528, %v2580
    %v2582 = vpop.f32.mrb[0].mxu0
    %v2583 = vadd.f32 %v2530, %v2582
    %v2584 = vpop.f32.mrb[0].mxu0
    %v2585 = vadd.f32 %v2532, %v2584
    %2586 = vdwg.mxu0
    %2587 = vst [vmem:[#allocation14] sm:$0xff] %v2569
    %2588 = vst [vmem:[#allocation14 + $0x8] sm:$0xff] %v2571
    %2589 = vst [vmem:[#allocation14 + $0x10] sm:$0xff] %v2573
    %2590 = vst [vmem:[#allocation14 + $0x18] sm:$0xff] %v2575
    %2591 = vst [vmem:[#allocation14 + $0x20] sm:$0xff] %v2579
    %2592 = vst [vmem:[#allocation14 + $0x28] sm:$0xff] %v2581
    %2593 = vst [vmem:[#allocation14 + $0x30] sm:$0xff] %v2583
    %2594 = vst [vmem:[#allocation14 + $0x38] sm:$0xff] %v2585
    // Predicated region
    $region66: #{tpu_custom_call.1} parent=1 // pred_check
      _
    $region67: #{tpu_custom_call.1} parent=1 // pred_check_branch
      %2596 = sbr.rel (0) target = $region69
    $region68: #{tpu_custom_call.1} parent=1 // pred_region
      %s2598 = ssub.s32 1024, 1024
      %2599 = vsyncadd [#allocation4], %s2598
      %s2600 = sshll.u32 [#allocation14], 4
      %s2601 = int_to_ptr.vmem [resolvable:$true] %s2600
      %2606 = dma.vmem_to_hbm [thread:$0]  %s2601, 1024, %s9, [#allocation4], 256, 256, 16
    $region69: #{tpu_custom_call.1} parent=1 // pred_fallthru
      _
    // Predicated region
    $region70: #{tpu_custom_call.1} parent=1 // pred_check
      _
    $region71: #{tpu_custom_call.1} parent=1 // pred_check_branch
      %2608 = sbr.rel (0) target = $region73
    $region72: #{tpu_custom_call.1} parent=1 // pred_region
      %2609 = dma.done [#allocation4], 1024
    $region73: #{tpu_custom_call.1} parent=1 // pred_fallthru
      _
    %2610 = vsyncpa [#allocation3], 1
    %2611 = vsyncpa [#allocation6], 1
    %2612 = vsyncpa [#allocation9], 1
    %2613 = vsyncpa [#allocation12], 1
    %2614 = vsyncpa [#allocation4], 1

</llo_original>
